<compile_context>
chip_gen: v7x
topology: tpu7x:2x2x1
jax: 0.10.0
libtpu: 0.0.40
codegen_flags: <defaults>
</compile_context>

<pallas_src>
import functools

import jax
import jax.numpy as jnp
from jax.experimental import pallas as pl
from jax.experimental.pallas import tpu as pltpu


# ----------------------------- Pallas kernel -------------------------------

def _headline_lstm_kernel(ids_ref, emb_ref, wih_ref, whh_ref, b_ref,
                          out_ref, gx_ref):
    """Fused embedding(max_norm) + LSTM forward; returns last hidden state.

    ids_ref : (L*Bp, 1) int32   time-major token ids (padded batch)
    emb_ref : (V+1, E)  f32     embedding table
    wih_ref : (E, 4H)   bf16    W_ih^T, gate order [i, f, g, o]
    whh_ref : (H, 4H)   bf16    W_hh^T
    b_ref   : (1, 4H)   f32     b_ih + b_hh
    out_ref : (Bp, H)   f32     h_T
    gx_ref  : (L*Bp, 4H) f32    VMEM scratch for the hoisted input projection
    """
    Bp, H = out_ref.shape
    LB = gx_ref.shape[0]
    L = LB // Bp
    Vp = emb_ref.shape[0]

    # --- embedding table renorm (max_norm=1.0, L2 norm) ---------------------
    # Renormalizing the whole (tiny) table gives forward values identical to
    # PyTorch's renorm-at-lookup of only the gathered rows.
    table = emb_ref[...]                                           # (Vp, E) f32
    norms = jnp.sqrt(jnp.sum(table * table, axis=-1, keepdims=True))
    scale = jnp.where(norms > 1.0, 1.0 / (norms + 1e-7), 1.0)
    table_bf = (table * scale).astype(jnp.bfloat16)                # (Vp, E)

    # --- embedding gather as a one-hot MXU matmul (vocab is tiny) -----------
    ids = ids_ref[...]                                             # (L*Bp, 1)
    iota = jax.lax.broadcasted_iota(jnp.int32, (LB, Vp), 1)
    onehot = (ids == iota).astype(jnp.bfloat16)                    # (L*Bp, Vp)
    x_rows = jnp.dot(onehot, table_bf,
                     preferred_element_type=jnp.float32)           # (L*Bp, E)

    # --- input projection for ALL timesteps, bias folded in -----------------
    gx_ref[...] = (
        jnp.dot(x_rows.astype(jnp.bfloat16), wih_ref[...],
                preferred_element_type=jnp.float32)
        + b_ref[...]
    )                                                              # (L*Bp, 4H)

    h = jnp.zeros((Bp, H), jnp.float32)       # PyTorch default h0 = 0
    c = jnp.zeros((Bp, H), jnp.float32)       # PyTorch default c0 = 0

    # --- recurrence: fully unrolled (L small & static) ----------------------
    # Per step: one (Bp,H)x(H,4H) MXU matmul (W_hh streamed from VMEM via the
    # ref read inside the dot) + f32 gate math on full (8,128) tiles.
    for t in range(L):
        g = gx_ref[t * Bp:(t + 1) * Bp, :] + jnp.dot(
            h.astype(jnp.bfloat16), whh_ref[...],
            preferred_element_type=jnp.float32)                    # (Bp, 4H)
        i_g = jax.nn.sigmoid(g[:, 0 * H:1 * H])
        f_g = jax.nn.sigmoid(g[:, 1 * H:2 * H])
        g_g = jnp.tanh(g[:, 2 * H:3 * H])
        o_g = jax.nn.sigmoid(g[:, 3 * H:4 * H])
        c = f_g * c + i_g * g_g
        h = o_g * jnp.tanh(c)

    out_ref[...] = h.astype(out_ref.dtype)


@functools.partial(jax.jit,
                   static_argnames=("seq_len", "batch", "batch_pad", "hidden"))
def _headline_forward(ids, emb_w, wih_t, whh_t, bias, *,
                      seq_len, batch, batch_pad, hidden):
    """ids: (B, L) int32 -> (B, H) f32 (== ht[-1])."""
    # Pad batch to the sublane count and flatten time-major for the kernel.
    ids_p = jnp.pad(ids.astype(jnp.int32),
                    ((0, batch_pad - batch), (0, 0)))              # (Bp, L)
    ids_tm = jnp.transpose(ids_p, (1, 0)).reshape(seq_len * batch_pad, 1)

    vmem = pl.BlockSpec(memory_space=pltpu.MemorySpace.VMEM)
    out = pl.pallas_call(
        _headline_lstm_kernel,
        out_shape=jax.ShapeDtypeStruct((batch_pad, hidden), jnp.float32),
        in_specs=[vmem, vmem, vmem, vmem, vmem],
        out_specs=vmem,
        scratch_shapes=[pltpu.VMEM((seq_len * batch_pad, 4 * hidden),
                                   jnp.float32)],
    )(ids_tm, emb_w, wih_t, whh_t, bias)
    # Padded rows carry garbage (bias flows through the gates) — drop them.
    return out[:batch]


# ------------------------------ model wrapper -------------------------------

class HeadlineNetPallas:
    def __init__(self, headlines_vocab_size, headlines_words_seq_length,
                 embedding_vector_length=32, text_dropout=0, output_size=128,
                 key=None):
        self.V = headlines_vocab_size
        self.L = headlines_words_seq_length
        self.E = embedding_vector_length
        self.H = output_size
        # text_dropout only applies between stacked LSTM layers; num_layers=1
        # so it is a no-op in the forward pass.

        if key is None:
            key = jax.random.PRNGKey(0)
        k_emb, k_wih, k_whh, k_bih, k_bhh = jax.random.split(key, 5)

        # nn.Embedding init: N(0, 1); table has V+1 rows. Kept f32 (the renorm
        # and bf16 cast happen inside the kernel).
        self.emb_w = jax.random.normal(
            k_emb, (self.V + 1, self.E), dtype=jnp.float32)

        # nn.LSTM init: U(-1/sqrt(H), 1/sqrt(H)), gate order [i, f, g, o].
        s = 1.0 / jnp.sqrt(jnp.float32(self.H))
        w_ih = jax.random.uniform(k_wih, (4 * self.H, self.E), jnp.float32, -s, s)
        w_hh = jax.random.uniform(k_whh, (4 * self.H, self.H), jnp.float32, -s, s)
        b_ih = jax.random.uniform(k_bih, (4 * self.H,), jnp.float32, -s, s)
        b_hh = jax.random.uniform(k_bhh, (4 * self.H,), jnp.float32, -s, s)

        # Pre-transpose for right-multiplication; bf16 operands for the MXU
        # (f32 accumulation happens inside the kernel); bias stays f32.
        self.wih_t = w_ih.T.astype(jnp.bfloat16)                  # (E, 4H)
        self.whh_t = w_hh.T.astype(jnp.bfloat16)                  # (H, 4H)
        self.bias = (b_ih + b_hh).reshape(1, 4 * self.H).astype(jnp.float32)

    def __call__(self, x):
        """x: (B, L) int32 token ids -> (B, H) float32 (== ht[-1])."""
        B, L = x.shape
        B_pad = ((B + 7) // 8) * 8   # f32 sublane count
        # TODO(synk): PyTorch's max_norm also rewrites the embedding table in
        # place at lookup time; forward values match, that side effect is not
        # replicated.
        return _headline_forward(
            x, self.emb_w, self.wih_t, self.whh_t, self.bias,
            seq_len=L, batch=B, batch_pad=B_pad, hidden=self.H)


# ---------------------------------- main ------------------------------------

if __name__ == "__main__":
    vocab_size = 50
    seq_len = 8
    batch = 2
    embed_dim = 32
    hidden = 128

    model = HeadlineNetPallas(
        headlines_vocab_size=vocab_size,
        headlines_words_seq_length=seq_len,
        embedding_vector_length=embed_dim,
        output_size=hidden,
        key=jax.random.PRNGKey(0),
    )

    x = jax.random.randint(
        jax.random.PRNGKey(0), (batch, seq_len), 0, vocab_size + 1,
        dtype=jnp.int32)

    out = model(x)
    out = jax.block_until_ready(out)
    assert out.shape == (batch, hidden)
    assert out.dtype == jnp.float32
    assert bool(jnp.all(jnp.isfinite(out)))
    print("KERNEL_OK")
</pallas_src>

<mosaic_0001>
module attributes {stable_mosaic.version = 11 : i64} {
  func.func @_headline_lstm_kernel(%arg0: memref<64x1xi32, #tpu.memory_space<vmem>>, %arg1: memref<51x32xf32, #tpu.memory_space<vmem>>, %arg2: memref<32x512xbf16, #tpu.memory_space<vmem>>, %arg3: memref<128x512xbf16, #tpu.memory_space<vmem>>, %arg4: memref<1x512xf32, #tpu.memory_space<vmem>>, %arg5: memref<8x128xf32, #tpu.memory_space<vmem>>, %arg6: memref<64x512xf32, #tpu.memory_space<vmem>>) attributes {dimension_semantics = [], scalar_prefetch = 0 : i64, scratch_operands = 1 : i64, tpu.core_type = #tpu.core_type<tc>} {
    %c0 = arith.constant 0 : index
    %c0_0 = arith.constant 0 : index
    %0 = vector.load %arg1[%c0, %c0_0] : memref<51x32xf32, #tpu.memory_space<vmem>>, vector<51x32xf32>
    %1 = arith.mulf %0, %0 : vector<51x32xf32>
    %cst = arith.constant dense<0.000000e+00> : vector<51xf32>
    %2 = vector.multi_reduction <add>, %1, %cst [1] : vector<51x32xf32> to vector<51xf32>
    %3 = vector.shape_cast %2 : vector<51xf32> to vector<51x1xf32>
    %4 = math.sqrt %3 : vector<51x1xf32>
    %cst_1 = arith.constant 1.000000e+00 : f32
    %5 = vector.broadcast %cst_1 : f32 to vector<51x1xf32>
    %6 = arith.cmpf ogt, %4, %5 : vector<51x1xf32>
    %cst_2 = arith.constant 1.000000e-07 : f32
    %7 = vector.broadcast %cst_2 : f32 to vector<51x1xf32>
    %8 = arith.addf %4, %7 : vector<51x1xf32>
    %cst_3 = arith.constant 1.000000e+00 : f32
    %9 = vector.broadcast %cst_3 : f32 to vector<51x1xf32>
    %10 = arith.divf %9, %8 : vector<51x1xf32>
    %cst_4 = arith.constant 1.000000e+00 : f32
    %11 = vector.broadcast %cst_4 : f32 to vector<51x1xf32>
    %12 = arith.select %6, %10, %11 : vector<51x1xi1>, vector<51x1xf32>
    %13 = vector.broadcast %12 : vector<51x1xf32> to vector<51x32xf32>
    %14 = arith.mulf %0, %13 : vector<51x32xf32>
    %15 = arith.truncf %14 : vector<51x32xf32> to vector<51x32xbf16>
    %c0_5 = arith.constant 0 : index
    %c0_6 = arith.constant 0 : index
    %16 = vector.load %arg0[%c0_5, %c0_6] : memref<64x1xi32, #tpu.memory_space<vmem>>, vector<64x1xi32>
    %17 = tpu.iota {dimensions = array<i32: 1>} : vector<64x51xi32>
    %18 = vector.broadcast %16 : vector<64x1xi32> to vector<64x51xi32>
    %19 = arith.cmpi eq, %18, %17 : vector<64x51xi32>
    %20 = arith.extui %19 : vector<64x51xi1> to vector<64x51xi32>
    %21 = arith.sitofp %20 : vector<64x51xi32> to vector<64x51xf32>
    %22 = arith.truncf %21 : vector<64x51xf32> to vector<64x51xbf16>
    %cst_7 = arith.constant dense<0.000000e+00> : vector<64x32xf32>
    %23 = tpu.matmul %22, %15, %cst_7 {dimension_numbers = #tpu.dot_dimension_numbers<[1], [0], [0], [1], [0, 0, 1, 1], [], []>} : vector<64x51xbf16>, vector<51x32xbf16>, vector<64x32xf32> -> vector<64x32xf32>
    %24 = arith.truncf %23 : vector<64x32xf32> to vector<64x32xbf16>
    %c0_8 = arith.constant 0 : index
    %c0_9 = arith.constant 0 : index
    %25 = vector.load %arg2[%c0_8, %c0_9] : memref<32x512xbf16, #tpu.memory_space<vmem>>, vector<32x512xbf16>
    %cst_10 = arith.constant dense<0.000000e+00> : vector<64x512xf32>
    %26 = tpu.matmul %24, %25, %cst_10 {dimension_numbers = #tpu.dot_dimension_numbers<[1], [0], [0], [1], [0, 0, 1, 1], [], []>} : vector<64x32xbf16>, vector<32x512xbf16>, vector<64x512xf32> -> vector<64x512xf32>
    %c0_11 = arith.constant 0 : index
    %c0_12 = arith.constant 0 : index
    %27 = vector.load %arg4[%c0_11, %c0_12] : memref<1x512xf32, #tpu.memory_space<vmem>>, vector<1x512xf32>
    %28 = vector.broadcast %27 : vector<1x512xf32> to vector<64x512xf32>
    %29 = arith.addf %26, %28 : vector<64x512xf32>
    %c0_13 = arith.constant 0 : index
    %c0_14 = arith.constant 0 : index
    %30 = vector.load %arg6[%c0_13, %c0_14] : memref<64x512xf32, #tpu.memory_space<vmem>>, vector<64x512xf32>
    tpu.vector_store %arg6[%c0_13, %c0_14], %29 {strides = array<i32>} : memref<64x512xf32, #tpu.memory_space<vmem>>, vector<64x512xf32>,
    %cst_15 = arith.constant 0.000000e+00 : f32
    %31 = vector.broadcast %cst_15 : f32 to vector<8x128xf32>
    %cst_16 = arith.constant 0.000000e+00 : f32
    %32 = vector.broadcast %cst_16 : f32 to vector<8x128xf32>
    %c0_17 = arith.constant 0 : index
    %c0_18 = arith.constant 0 : index
    %33 = vector.load %arg6[%c0_17, %c0_18] : memref<64x512xf32, #tpu.memory_space<vmem>>, vector<8x512xf32>
    %34 = arith.truncf %31 : vector<8x128xf32> to vector<8x128xbf16>
    %c0_19 = arith.constant 0 : index
    %c0_20 = arith.constant 0 : index
    %35 = vector.load %arg3[%c0_19, %c0_20] : memref<128x512xbf16, #tpu.memory_space<vmem>>, vector<128x512xbf16>
    %cst_21 = arith.constant dense<0.000000e+00> : vector<8x512xf32>
    %36 = tpu.matmul %34, %35, %cst_21 {dimension_numbers = #tpu.dot_dimension_numbers<[1], [0], [0], [1], [0, 0, 1, 1], [], []>} : vector<8x128xbf16>, vector<128x512xbf16>, vector<8x512xf32> -> vector<8x512xf32>
    %37 = arith.addf %33, %36 : vector<8x512xf32>
    %38 = vector.extract_strided_slice %37 {offsets = [0, 0], sizes = [8, 128], strides = [1, 1]} : vector<8x512xf32> to vector<8x128xf32>
    %39 = arith.negf %38 : vector<8x128xf32>
    %40 = math.exp %39 : vector<8x128xf32>
    %cst_22 = arith.constant 1.000000e+00 : f32
    %41 = vector.broadcast %cst_22 : f32 to vector<8x128xf32>
    %42 = arith.addf %41, %40 : vector<8x128xf32>
    %43 = arith.divf %41, %42 : vector<8x128xf32>
    %44 = vector.extract_strided_slice %37 {offsets = [0, 128], sizes = [8, 128], strides = [1, 1]} : vector<8x512xf32> to vector<8x128xf32>
    %45 = arith.negf %44 : vector<8x128xf32>
    %46 = math.exp %45 : vector<8x128xf32>
    %cst_23 = arith.constant 1.000000e+00 : f32
    %47 = vector.broadcast %cst_23 : f32 to vector<8x128xf32>
    %48 = arith.addf %47, %46 : vector<8x128xf32>
    %49 = arith.divf %47, %48 : vector<8x128xf32>
    %50 = vector.extract_strided_slice %37 {offsets = [0, 256], sizes = [8, 128], strides = [1, 1]} : vector<8x512xf32> to vector<8x128xf32>
    %51 = math.tanh %50 : vector<8x128xf32>
    %52 = vector.extract_strided_slice %37 {offsets = [0, 384], sizes = [8, 128], strides = [1, 1]} : vector<8x512xf32> to vector<8x128xf32>
    %53 = arith.negf %52 : vector<8x128xf32>
    %54 = math.exp %53 : vector<8x128xf32>
    %cst_24 = arith.constant 1.000000e+00 : f32
    %55 = vector.broadcast %cst_24 : f32 to vector<8x128xf32>
    %56 = arith.addf %55, %54 : vector<8x128xf32>
    %57 = arith.divf %55, %56 : vector<8x128xf32>
    %58 = arith.mulf %49, %32 : vector<8x128xf32>
    %59 = arith.mulf %43, %51 : vector<8x128xf32>
    %60 = arith.addf %58, %59 : vector<8x128xf32>
    %61 = math.tanh %60 : vector<8x128xf32>
    %62 = arith.mulf %57, %61 : vector<8x128xf32>
    %c8 = arith.constant 8 : index
    %c0_25 = arith.constant 0 : index
    %63 = vector.load %arg6[%c8, %c0_25] : memref<64x512xf32, #tpu.memory_space<vmem>>, vector<8x512xf32>
    %64 = arith.truncf %62 : vector<8x128xf32> to vector<8x128xbf16>
    %c0_26 = arith.constant 0 : index
    %c0_27 = arith.constant 0 : index
    %65 = vector.load %arg3[%c0_26, %c0_27] : memref<128x512xbf16, #tpu.memory_space<vmem>>, vector<128x512xbf16>
    %cst_28 = arith.constant dense<0.000000e+00> : vector<8x512xf32>
    %66 = tpu.matmul %64, %65, %cst_28 {dimension_numbers = #tpu.dot_dimension_numbers<[1], [0], [0], [1], [0, 0, 1, 1], [], []>} : vector<8x128xbf16>, vector<128x512xbf16>, vector<8x512xf32> -> vector<8x512xf32>
    %67 = arith.addf %63, %66 : vector<8x512xf32>
    %68 = vector.extract_strided_slice %67 {offsets = [0, 0], sizes = [8, 128], strides = [1, 1]} : vector<8x512xf32> to vector<8x128xf32>
    %69 = arith.negf %68 : vector<8x128xf32>
    %70 = math.exp %69 : vector<8x128xf32>
    %cst_29 = arith.constant 1.000000e+00 : f32
    %71 = vector.broadcast %cst_29 : f32 to vector<8x128xf32>
    %72 = arith.addf %71, %70 : vector<8x128xf32>
    %73 = arith.divf %71, %72 : vector<8x128xf32>
    %74 = vector.extract_strided_slice %67 {offsets = [0, 128], sizes = [8, 128], strides = [1, 1]} : vector<8x512xf32> to vector<8x128xf32>
    %75 = arith.negf %74 : vector<8x128xf32>
    %76 = math.exp %75 : vector<8x128xf32>
    %cst_30 = arith.constant 1.000000e+00 : f32
    %77 = vector.broadcast %cst_30 : f32 to vector<8x128xf32>
    %78 = arith.addf %77, %76 : vector<8x128xf32>
    %79 = arith.divf %77, %78 : vector<8x128xf32>
    %80 = vector.extract_strided_slice %67 {offsets = [0, 256], sizes = [8, 128], strides = [1, 1]} : vector<8x512xf32> to vector<8x128xf32>
    %81 = math.tanh %80 : vector<8x128xf32>
    %82 = vector.extract_strided_slice %67 {offsets = [0, 384], sizes = [8, 128], strides = [1, 1]} : vector<8x512xf32> to vector<8x128xf32>
    %83 = arith.negf %82 : vector<8x128xf32>
    %84 = math.exp %83 : vector<8x128xf32>
    %cst_31 = arith.constant 1.000000e+00 : f32
    %85 = vector.broadcast %cst_31 : f32 to vector<8x128xf32>
    %86 = arith.addf %85, %84 : vector<8x128xf32>
    %87 = arith.divf %85, %86 : vector<8x128xf32>
    %88 = arith.mulf %79, %60 : vector<8x128xf32>
    %89 = arith.mulf %73, %81 : vector<8x128xf32>
    %90 = arith.addf %88, %89 : vector<8x128xf32>
    %91 = math.tanh %90 : vector<8x128xf32>
    %92 = arith.mulf %87, %91 : vector<8x128xf32>
    %c16 = arith.constant 16 : index
    %c0_32 = arith.constant 0 : index
    %93 = vector.load %arg6[%c16, %c0_32] : memref<64x512xf32, #tpu.memory_space<vmem>>, vector<8x512xf32>
    %94 = arith.truncf %92 : vector<8x128xf32> to vector<8x128xbf16>
    %c0_33 = arith.constant 0 : index
    %c0_34 = arith.constant 0 : index
    %95 = vector.load %arg3[%c0_33, %c0_34] : memref<128x512xbf16, #tpu.memory_space<vmem>>, vector<128x512xbf16>
    %cst_35 = arith.constant dense<0.000000e+00> : vector<8x512xf32>
    %96 = tpu.matmul %94, %95, %cst_35 {dimension_numbers = #tpu.dot_dimension_numbers<[1], [0], [0], [1], [0, 0, 1, 1], [], []>} : vector<8x128xbf16>, vector<128x512xbf16>, vector<8x512xf32> -> vector<8x512xf32>
    %97 = arith.addf %93, %96 : vector<8x512xf32>
    %98 = vector.extract_strided_slice %97 {offsets = [0, 0], sizes = [8, 128], strides = [1, 1]} : vector<8x512xf32> to vector<8x128xf32>
    %99 = arith.negf %98 : vector<8x128xf32>
    %100 = math.exp %99 : vector<8x128xf32>
    %cst_36 = arith.constant 1.000000e+00 : f32
    %101 = vector.broadcast %cst_36 : f32 to vector<8x128xf32>
    %102 = arith.addf %101, %100 : vector<8x128xf32>
    %103 = arith.divf %101, %102 : vector<8x128xf32>
    %104 = vector.extract_strided_slice %97 {offsets = [0, 128], sizes = [8, 128], strides = [1, 1]} : vector<8x512xf32> to vector<8x128xf32>
    %105 = arith.negf %104 : vector<8x128xf32>
    %106 = math.exp %105 : vector<8x128xf32>
    %cst_37 = arith.constant 1.000000e+00 : f32
    %107 = vector.broadcast %cst_37 : f32 to vector<8x128xf32>
    %108 = arith.addf %107, %106 : vector<8x128xf32>
    %109 = arith.divf %107, %108 : vector<8x128xf32>
    %110 = vector.extract_strided_slice %97 {offsets = [0, 256], sizes = [8, 128], strides = [1, 1]} : vector<8x512xf32> to vector<8x128xf32>
    %111 = math.tanh %110 : vector<8x128xf32>
    %112 = vector.extract_strided_slice %97 {offsets = [0, 384], sizes = [8, 128], strides = [1, 1]} : vector<8x512xf32> to vector<8x128xf32>
    %113 = arith.negf %112 : vector<8x128xf32>
    %114 = math.exp %113 : vector<8x128xf32>
    %cst_38 = arith.constant 1.000000e+00 : f32
    %115 = vector.broadcast %cst_38 : f32 to vector<8x128xf32>
    %116 = arith.addf %115, %114 : vector<8x128xf32>
    %117 = arith.divf %115, %116 : vector<8x128xf32>
    %118 = arith.mulf %109, %90 : vector<8x128xf32>
    %119 = arith.mulf %103, %111 : vector<8x128xf32>
    %120 = arith.addf %118, %119 : vector<8x128xf32>
    %121 = math.tanh %120 : vector<8x128xf32>
    %122 = arith.mulf %117, %121 : vector<8x128xf32>
    %c24 = arith.constant 24 : index
    %c0_39 = arith.constant 0 : index
    %123 = vector.load %arg6[%c24, %c0_39] : memref<64x512xf32, #tpu.memory_space<vmem>>, vector<8x512xf32>
    %124 = arith.truncf %122 : vector<8x128xf32> to vector<8x128xbf16>
    %c0_40 = arith.constant 0 : index
    %c0_41 = arith.constant 0 : index
    %125 = vector.load %arg3[%c0_40, %c0_41] : memref<128x512xbf16, #tpu.memory_space<vmem>>, vector<128x512xbf16>
    %cst_42 = arith.constant dense<0.000000e+00> : vector<8x512xf32>
    %126 = tpu.matmul %124, %125, %cst_42 {dimension_numbers = #tpu.dot_dimension_numbers<[1], [0], [0], [1], [0, 0, 1, 1], [], []>} : vector<8x128xbf16>, vector<128x512xbf16>, vector<8x512xf32> -> vector<8x512xf32>
    %127 = arith.addf %123, %126 : vector<8x512xf32>
    %128 = vector.extract_strided_slice %127 {offsets = [0, 0], sizes = [8, 128], strides = [1, 1]} : vector<8x512xf32> to vector<8x128xf32>
    %129 = arith.negf %128 : vector<8x128xf32>
    %130 = math.exp %129 : vector<8x128xf32>
    %cst_43 = arith.constant 1.000000e+00 : f32
    %131 = vector.broadcast %cst_43 : f32 to vector<8x128xf32>
    %132 = arith.addf %131, %130 : vector<8x128xf32>
    %133 = arith.divf %131, %132 : vector<8x128xf32>
    %134 = vector.extract_strided_slice %127 {offsets = [0, 128], sizes = [8, 128], strides = [1, 1]} : vector<8x512xf32> to vector<8x128xf32>
    %135 = arith.negf %134 : vector<8x128xf32>
    %136 = math.exp %135 : vector<8x128xf32>
    %cst_44 = arith.constant 1.000000e+00 : f32
    %137 = vector.broadcast %cst_44 : f32 to vector<8x128xf32>
    %138 = arith.addf %137, %136 : vector<8x128xf32>
    %139 = arith.divf %137, %138 : vector<8x128xf32>
    %140 = vector.extract_strided_slice %127 {offsets = [0, 256], sizes = [8, 128], strides = [1, 1]} : vector<8x512xf32> to vector<8x128xf32>
    %141 = math.tanh %140 : vector<8x128xf32>
    %142 = vector.extract_strided_slice %127 {offsets = [0, 384], sizes = [8, 128], strides = [1, 1]} : vector<8x512xf32> to vector<8x128xf32>
    %143 = arith.negf %142 : vector<8x128xf32>
    %144 = math.exp %143 : vector<8x128xf32>
    %cst_45 = arith.constant 1.000000e+00 : f32
    %145 = vector.broadcast %cst_45 : f32 to vector<8x128xf32>
    %146 = arith.addf %145, %144 : vector<8x128xf32>
    %147 = arith.divf %145, %146 : vector<8x128xf32>
    %148 = arith.mulf %139, %120 : vector<8x128xf32>
    %149 = arith.mulf %133, %141 : vector<8x128xf32>
    %150 = arith.addf %148, %149 : vector<8x128xf32>
    %151 = math.tanh %150 : vector<8x128xf32>
    %152 = arith.mulf %147, %151 : vector<8x128xf32>
    %c32 = arith.constant 32 : index
    %c0_46 = arith.constant 0 : index
    %153 = vector.load %arg6[%c32, %c0_46] : memref<64x512xf32, #tpu.memory_space<vmem>>, vector<8x512xf32>
    %154 = arith.truncf %152 : vector<8x128xf32> to vector<8x128xbf16>
    %c0_47 = arith.constant 0 : index
    %c0_48 = arith.constant 0 : index
    %155 = vector.load %arg3[%c0_47, %c0_48] : memref<128x512xbf16, #tpu.memory_space<vmem>>, vector<128x512xbf16>
    %cst_49 = arith.constant dense<0.000000e+00> : vector<8x512xf32>
    %156 = tpu.matmul %154, %155, %cst_49 {dimension_numbers = #tpu.dot_dimension_numbers<[1], [0], [0], [1], [0, 0, 1, 1], [], []>} : vector<8x128xbf16>, vector<128x512xbf16>, vector<8x512xf32> -> vector<8x512xf32>
    %157 = arith.addf %153, %156 : vector<8x512xf32>
    %158 = vector.extract_strided_slice %157 {offsets = [0, 0], sizes = [8, 128], strides = [1, 1]} : vector<8x512xf32> to vector<8x128xf32>
    %159 = arith.negf %158 : vector<8x128xf32>
    %160 = math.exp %159 : vector<8x128xf32>
    %cst_50 = arith.constant 1.000000e+00 : f32
    %161 = vector.broadcast %cst_50 : f32 to vector<8x128xf32>
    %162 = arith.addf %161, %160 : vector<8x128xf32>
    %163 = arith.divf %161, %162 : vector<8x128xf32>
    %164 = vector.extract_strided_slice %157 {offsets = [0, 128], sizes = [8, 128], strides = [1, 1]} : vector<8x512xf32> to vector<8x128xf32>
    %165 = arith.negf %164 : vector<8x128xf32>
    %166 = math.exp %165 : vector<8x128xf32>
    %cst_51 = arith.constant 1.000000e+00 : f32
    %167 = vector.broadcast %cst_51 : f32 to vector<8x128xf32>
    %168 = arith.addf %167, %166 : vector<8x128xf32>
    %169 = arith.divf %167, %168 : vector<8x128xf32>
    %170 = vector.extract_strided_slice %157 {offsets = [0, 256], sizes = [8, 128], strides = [1, 1]} : vector<8x512xf32> to vector<8x128xf32>
    %171 = math.tanh %170 : vector<8x128xf32>
    %172 = vector.extract_strided_slice %157 {offsets = [0, 384], sizes = [8, 128], strides = [1, 1]} : vector<8x512xf32> to vector<8x128xf32>
    %173 = arith.negf %172 : vector<8x128xf32>
    %174 = math.exp %173 : vector<8x128xf32>
    %cst_52 = arith.constant 1.000000e+00 : f32
    %175 = vector.broadcast %cst_52 : f32 to vector<8x128xf32>
    %176 = arith.addf %175, %174 : vector<8x128xf32>
    %177 = arith.divf %175, %176 : vector<8x128xf32>
    %178 = arith.mulf %169, %150 : vector<8x128xf32>
    %179 = arith.mulf %163, %171 : vector<8x128xf32>
    %180 = arith.addf %178, %179 : vector<8x128xf32>
    %181 = math.tanh %180 : vector<8x128xf32>
    %182 = arith.mulf %177, %181 : vector<8x128xf32>
    %c40 = arith.constant 40 : index
    %c0_53 = arith.constant 0 : index
    %183 = vector.load %arg6[%c40, %c0_53] : memref<64x512xf32, #tpu.memory_space<vmem>>, vector<8x512xf32>
    %184 = arith.truncf %182 : vector<8x128xf32> to vector<8x128xbf16>
    %c0_54 = arith.constant 0 : index
    %c0_55 = arith.constant 0 : index
    %185 = vector.load %arg3[%c0_54, %c0_55] : memref<128x512xbf16, #tpu.memory_space<vmem>>, vector<128x512xbf16>
    %cst_56 = arith.constant dense<0.000000e+00> : vector<8x512xf32>
    %186 = tpu.matmul %184, %185, %cst_56 {dimension_numbers = #tpu.dot_dimension_numbers<[1], [0], [0], [1], [0, 0, 1, 1], [], []>} : vector<8x128xbf16>, vector<128x512xbf16>, vector<8x512xf32> -> vector<8x512xf32>
    %187 = arith.addf %183, %186 : vector<8x512xf32>
    %188 = vector.extract_strided_slice %187 {offsets = [0, 0], sizes = [8, 128], strides = [1, 1]} : vector<8x512xf32> to vector<8x128xf32>
    %189 = arith.negf %188 : vector<8x128xf32>
    %190 = math.exp %189 : vector<8x128xf32>
    %cst_57 = arith.constant 1.000000e+00 : f32
    %191 = vector.broadcast %cst_57 : f32 to vector<8x128xf32>
    %192 = arith.addf %191, %190 : vector<8x128xf32>
    %193 = arith.divf %191, %192 : vector<8x128xf32>
    %194 = vector.extract_strided_slice %187 {offsets = [0, 128], sizes = [8, 128], strides = [1, 1]} : vector<8x512xf32> to vector<8x128xf32>
    %195 = arith.negf %194 : vector<8x128xf32>
    %196 = math.exp %195 : vector<8x128xf32>
    %cst_58 = arith.constant 1.000000e+00 : f32
    %197 = vector.broadcast %cst_58 : f32 to vector<8x128xf32>
    %198 = arith.addf %197, %196 : vector<8x128xf32>
    %199 = arith.divf %197, %198 : vector<8x128xf32>
    %200 = vector.extract_strided_slice %187 {offsets = [0, 256], sizes = [8, 128], strides = [1, 1]} : vector<8x512xf32> to vector<8x128xf32>
    %201 = math.tanh %200 : vector<8x128xf32>
    %202 = vector.extract_strided_slice %187 {offsets = [0, 384], sizes = [8, 128], strides = [1, 1]} : vector<8x512xf32> to vector<8x128xf32>
    %203 = arith.negf %202 : vector<8x128xf32>
    %204 = math.exp %203 : vector<8x128xf32>
    %cst_59 = arith.constant 1.000000e+00 : f32
    %205 = vector.broadcast %cst_59 : f32 to vector<8x128xf32>
    %206 = arith.addf %205, %204 : vector<8x128xf32>
    %207 = arith.divf %205, %206 : vector<8x128xf32>
    %208 = arith.mulf %199, %180 : vector<8x128xf32>
    %209 = arith.mulf %193, %201 : vector<8x128xf32>
    %210 = arith.addf %208, %209 : vector<8x128xf32>
    %211 = math.tanh %210 : vector<8x128xf32>
    %212 = arith.mulf %207, %211 : vector<8x128xf32>
    %c48 = arith.constant 48 : index
    %c0_60 = arith.constant 0 : index
    %213 = vector.load %arg6[%c48, %c0_60] : memref<64x512xf32, #tpu.memory_space<vmem>>, vector<8x512xf32>
    %214 = arith.truncf %212 : vector<8x128xf32> to vector<8x128xbf16>
    %c0_61 = arith.constant 0 : index
    %c0_62 = arith.constant 0 : index
    %215 = vector.load %arg3[%c0_61, %c0_62] : memref<128x512xbf16, #tpu.memory_space<vmem>>, vector<128x512xbf16>
    %cst_63 = arith.constant dense<0.000000e+00> : vector<8x512xf32>
    %216 = tpu.matmul %214, %215, %cst_63 {dimension_numbers = #tpu.dot_dimension_numbers<[1], [0], [0], [1], [0, 0, 1, 1], [], []>} : vector<8x128xbf16>, vector<128x512xbf16>, vector<8x512xf32> -> vector<8x512xf32>
    %217 = arith.addf %213, %216 : vector<8x512xf32>
    %218 = vector.extract_strided_slice %217 {offsets = [0, 0], sizes = [8, 128], strides = [1, 1]} : vector<8x512xf32> to vector<8x128xf32>
    %219 = arith.negf %218 : vector<8x128xf32>
    %220 = math.exp %219 : vector<8x128xf32>
    %cst_64 = arith.constant 1.000000e+00 : f32
    %221 = vector.broadcast %cst_64 : f32 to vector<8x128xf32>
    %222 = arith.addf %221, %220 : vector<8x128xf32>
    %223 = arith.divf %221, %222 : vector<8x128xf32>
    %224 = vector.extract_strided_slice %217 {offsets = [0, 128], sizes = [8, 128], strides = [1, 1]} : vector<8x512xf32> to vector<8x128xf32>
    %225 = arith.negf %224 : vector<8x128xf32>
    %226 = math.exp %225 : vector<8x128xf32>
    %cst_65 = arith.constant 1.000000e+00 : f32
    %227 = vector.broadcast %cst_65 : f32 to vector<8x128xf32>
    %228 = arith.addf %227, %226 : vector<8x128xf32>
    %229 = arith.divf %227, %228 : vector<8x128xf32>
    %230 = vector.extract_strided_slice %217 {offsets = [0, 256], sizes = [8, 128], strides = [1, 1]} : vector<8x512xf32> to vector<8x128xf32>
    %231 = math.tanh %230 : vector<8x128xf32>
    %232 = vector.extract_strided_slice %217 {offsets = [0, 384], sizes = [8, 128], strides = [1, 1]} : vector<8x512xf32> to vector<8x128xf32>
    %233 = arith.negf %232 : vector<8x128xf32>
    %234 = math.exp %233 : vector<8x128xf32>
    %cst_66 = arith.constant 1.000000e+00 : f32
    %235 = vector.broadcast %cst_66 : f32 to vector<8x128xf32>
    %236 = arith.addf %235, %234 : vector<8x128xf32>
    %237 = arith.divf %235, %236 : vector<8x128xf32>
    %238 = arith.mulf %229, %210 : vector<8x128xf32>
    %239 = arith.mulf %223, %231 : vector<8x128xf32>
    %240 = arith.addf %238, %239 : vector<8x128xf32>
    %241 = math.tanh %240 : vector<8x128xf32>
    %242 = arith.mulf %237, %241 : vector<8x128xf32>
    %c56 = arith.constant 56 : index
    %c0_67 = arith.constant 0 : index
    %243 = vector.load %arg6[%c56, %c0_67] : memref<64x512xf32, #tpu.memory_space<vmem>>, vector<8x512xf32>
    %244 = arith.truncf %242 : vector<8x128xf32> to vector<8x128xbf16>
    %c0_68 = arith.constant 0 : index
    %c0_69 = arith.constant 0 : index
    %245 = vector.load %arg3[%c0_68, %c0_69] : memref<128x512xbf16, #tpu.memory_space<vmem>>, vector<128x512xbf16>
    %cst_70 = arith.constant dense<0.000000e+00> : vector<8x512xf32>
    %246 = tpu.matmul %244, %245, %cst_70 {dimension_numbers = #tpu.dot_dimension_numbers<[1], [0], [0], [1], [0, 0, 1, 1], [], []>} : vector<8x128xbf16>, vector<128x512xbf16>, vector<8x512xf32> -> vector<8x512xf32>
    %247 = arith.addf %243, %246 : vector<8x512xf32>
    %248 = vector.extract_strided_slice %247 {offsets = [0, 0], sizes = [8, 128], strides = [1, 1]} : vector<8x512xf32> to vector<8x128xf32>
    %249 = arith.negf %248 : vector<8x128xf32>
    %250 = math.exp %249 : vector<8x128xf32>
    %cst_71 = arith.constant 1.000000e+00 : f32
    %251 = vector.broadcast %cst_71 : f32 to vector<8x128xf32>
    %252 = arith.addf %251, %250 : vector<8x128xf32>
    %253 = arith.divf %251, %252 : vector<8x128xf32>
    %254 = vector.extract_strided_slice %247 {offsets = [0, 128], sizes = [8, 128], strides = [1, 1]} : vector<8x512xf32> to vector<8x128xf32>
    %255 = arith.negf %254 : vector<8x128xf32>
    %256 = math.exp %255 : vector<8x128xf32>
    %cst_72 = arith.constant 1.000000e+00 : f32
    %257 = vector.broadcast %cst_72 : f32 to vector<8x128xf32>
    %258 = arith.addf %257, %256 : vector<8x128xf32>
    %259 = arith.divf %257, %258 : vector<8x128xf32>
    %260 = vector.extract_strided_slice %247 {offsets = [0, 256], sizes = [8, 128], strides = [1, 1]} : vector<8x512xf32> to vector<8x128xf32>
    %261 = math.tanh %260 : vector<8x128xf32>
    %262 = vector.extract_strided_slice %247 {offsets = [0, 384], sizes = [8, 128], strides = [1, 1]} : vector<8x512xf32> to vector<8x128xf32>
    %263 = arith.negf %262 : vector<8x128xf32>
    %264 = math.exp %263 : vector<8x128xf32>
    %cst_73 = arith.constant 1.000000e+00 : f32
    %265 = vector.broadcast %cst_73 : f32 to vector<8x128xf32>
    %266 = arith.addf %265, %264 : vector<8x128xf32>
    %267 = arith.divf %265, %266 : vector<8x128xf32>
    %268 = arith.mulf %259, %240 : vector<8x128xf32>
    %269 = arith.mulf %253, %261 : vector<8x128xf32>
    %270 = arith.addf %268, %269 : vector<8x128xf32>
    %271 = math.tanh %270 : vector<8x128xf32>
    %272 = arith.mulf %267, %271 : vector<8x128xf32>
    %c0_74 = arith.constant 0 : index
    %c0_75 = arith.constant 0 : index
    %273 = vector.load %arg5[%c0_74, %c0_75] : memref<8x128xf32, #tpu.memory_space<vmem>>, vector<8x128xf32>
    tpu.vector_store %arg5[%c0_74, %c0_75], %272 {strides = array<i32>} : memref<8x128xf32, #tpu.memory_space<vmem>>, vector<8x128xf32>,
    return
  }
}

</mosaic_0001>

<llo_original>
// kernel: _headline_forward.1
$region0: #{_headline_forward.1}
  #allocation0 [shape = 'u32[]', space=smem, size = 0x4, offset = 0x4, fixed_abs, tag = 'smem constant byte address 0x4 - core index']
  #allocation1 [shape = 'u32[144,128]{1,0:T(1,128)}', space=vmem, size = 0x12000, scoped, tag = 'internal scratch']
  #allocation2 [shape = 'f32[64,512]{1,0:T(8,128)}', space=vmem, size = 0x20000, scoped, tag = 'scratch operand']
  %s0 = inlined_call_operand.vmem [shape: s32[64,1], index: 0, kind: input, shape index: {}]
  %s1 = inlined_call_operand.vmem [shape: f32[51,32], index: 1, kind: input, shape index: {}]
  %s2 = inlined_call_operand.vmem [shape: bf16[32,512], index: 2, kind: input, shape index: {}]
  %s3 = inlined_call_operand.hbm [shape: bf16[128,512], index: 3, kind: input, shape index: {}]
  %s4 = inlined_call_operand.vmem [shape: f32[1,512], index: 4, kind: input, shape index: {}]
  %s5 = inlined_call_operand.vmem [shape: f32[8,128], index: 5, kind: output, shape index: {}]
  %s6 = sld [smem:[#allocation0]]
  $region34: #{_headline_forward.1} parent=0
    _
  %s8 = ssub.s32 1, %s6
  %s9 = scalar_select 0, %s8, %s6
  $region1: #{_headline_forward.1} parent=0
    #allocation3 [shape = 'u8[131072]{0}', space=vmem, size = 0x20000, scoped, tag = 'input window, operand 3, single buffered']
    #allocation4 [shape = 's32[1]{0}', space=sflag, size = 0x4, scoped, tag = 'scoped memory for _headline_forward.1']
    %10 = vsyncpa [#allocation4], 0
    // Predicated region
    $region2: #{_headline_forward.1} parent=1 // pred_check
      _
    $region3: #{_headline_forward.1} parent=1 // pred_check_branch
      %12 = sbr.rel (0) target = $region5
    $region4: #{_headline_forward.1} parent=1 // pred_region
      _
    $region5: #{_headline_forward.1} parent=1 // pred_fallthru
      _
    // Predicated region
    $region6: #{_headline_forward.1} parent=1 // pred_check
      _
    $region7: #{_headline_forward.1} parent=1 // pred_check_branch
      %14 = sbr.rel (0) target = $region9
    $region8: #{_headline_forward.1} parent=1 // pred_region
      _
    $region9: #{_headline_forward.1} parent=1 // pred_fallthru
      _
    // Predicated region
    $region10: #{_headline_forward.1} parent=1 // pred_check
      _
    $region11: #{_headline_forward.1} parent=1 // pred_check_branch
      %16 = sbr.rel (0) target = $region13
    $region12: #{_headline_forward.1} parent=1 // pred_region
      _
    $region13: #{_headline_forward.1} parent=1 // pred_fallthru
      _
    // Predicated region
    $region14: #{_headline_forward.1} parent=1 // pred_check
      _
    $region15: #{_headline_forward.1} parent=1 // pred_check_branch
      %18 = sbr.rel (0) target = $region17
    $region16: #{_headline_forward.1} parent=1 // pred_region
      %s20 = ssub.s32 4096, 4096
      %21 = vsyncadd [#allocation4], %s20
      %s22 = sshll.u32 [#allocation3], 4
      %s23 = int_to_ptr.vmem [resolvable:$true] %s22
      %28 = dma.hbm_to_vmem [thread:$0]  %s3, 4096, %s23, [#allocation4], 256, 256, 16
    $region17: #{_headline_forward.1} parent=1 // pred_fallthru
      _
    // Predicated region
    $region18: #{_headline_forward.1} parent=1 // pred_check
      _
    $region19: #{_headline_forward.1} parent=1 // pred_check_branch
      %30 = sbr.rel (0) target = $region21
    $region20: #{_headline_forward.1} parent=1 // pred_region
      _
    $region21: #{_headline_forward.1} parent=1 // pred_fallthru
      _
    // Predicated region
    $region22: #{_headline_forward.1} parent=1 // pred_check
      _
    $region23: #{_headline_forward.1} parent=1 // pred_check_branch
      %32 = sbr.rel (0) target = $region25
    $region24: #{_headline_forward.1} parent=1 // pred_region
      %33 = dma.done [#allocation4], 4096
    $region25: #{_headline_forward.1} parent=1 // pred_fallthru
      _
    %v35 = vld [vmem:[%s1] sm:$0xff]
    %v36 = vld [vmem:[%s1 + $0x8] sm:$0xff]
    %v37 = vld [vmem:[%s1 + $0x10] sm:$0xff]
    %v38 = vld [vmem:[%s1 + $0x18] sm:$0xff]
    %v39 = vld [vmem:[%s1 + $0x20] sm:$0xff]
    %v40 = vld [vmem:[%s1 + $0x28] sm:$0xff]
    %v41 = vld [vmem:[%s1 + $0x30] sm:$0x7]
    %v42 = vmul.f32 %v35, %v35
    %v43 = vmul.f32 %v36, %v36
    %v44 = vmul.f32 %v37, %v37
    %v45 = vmul.f32 %v38, %v38
    %v46 = vmul.f32 %v39, %v39
    %v47 = vmul.f32 %v40, %v40
    %v48 = vmul.f32 %v41, %v41
    %vm49 = vcmask 261120
    %v50 = vsel %vm49, %v42, 0.0
    %51 = vadd.xlane.f32.xlu0 %v50
    %v52 = vpop.xlane.xlu0 %51
    %v53 = vsel %vm49, %v43, 0.0
    %54 = vadd.xlane.f32.xlu0 %v53
    %v55 = vpop.xlane.xlu0 %54
    %v56 = vsel %vm49, %v44, 0.0
    %57 = vadd.xlane.f32.xlu0 %v56
    %v58 = vpop.xlane.xlu0 %57
    %v59 = vsel %vm49, %v45, 0.0
    %60 = vadd.xlane.f32.xlu0 %v59
    %v61 = vpop.xlane.xlu0 %60
    %v62 = vsel %vm49, %v46, 0.0
    %63 = vadd.xlane.f32.xlu0 %v62
    %v64 = vpop.xlane.xlu0 %63
    %v65 = vsel %vm49, %v47, 0.0
    %66 = vadd.xlane.f32.xlu0 %v65
    %v67 = vpop.xlane.xlu0 %66
    %vm68 = vcmask 256000
    %v69 = vsel %vm68, %v48, 0.0
    %70 = vadd.xlane.f32.xlu0 %v69
    %v71 = vpop.xlane.xlu0 %70
    %v72 = vrsqrt.pop %v52
    %v73 = vmul.f32 %v52, %v72
    %vm74 = vcmp.eq.f32.partialorder %v52, inf
    %v75 = vsel %vm74, %v52, %v73
    %vm76 = vcmp.eq.f32.partialorder %v52, 0.0
    %v77 = vand.u32 %v52, 2147483648
    %v78 = vsel %vm76, %v77, %v75
    %v79 = vrsqrt.pop %v55
    %v80 = vmul.f32 %v55, %v79
    %vm81 = vcmp.eq.f32.partialorder %v55, inf
    %v82 = vsel %vm81, %v55, %v80
    %vm83 = vcmp.eq.f32.partialorder %v55, 0.0
    %v84 = vand.u32 %v55, 2147483648
    %v85 = vsel %vm83, %v84, %v82
    %v86 = vrsqrt.pop %v58
    %v87 = vmul.f32 %v58, %v86
    %vm88 = vcmp.eq.f32.partialorder %v58, inf
    %v89 = vsel %vm88, %v58, %v87
    %vm90 = vcmp.eq.f32.partialorder %v58, 0.0
    %v91 = vand.u32 %v58, 2147483648
    %v92 = vsel %vm90, %v91, %v89
    %v93 = vrsqrt.pop %v61
    %v94 = vmul.f32 %v61, %v93
    %vm95 = vcmp.eq.f32.partialorder %v61, inf
    %v96 = vsel %vm95, %v61, %v94
    %vm97 = vcmp.eq.f32.partialorder %v61, 0.0
    %v98 = vand.u32 %v61, 2147483648
    %v99 = vsel %vm97, %v98, %v96
    %v100 = vrsqrt.pop %v64
    %v101 = vmul.f32 %v64, %v100
    %vm102 = vcmp.eq.f32.partialorder %v64, inf
    %v103 = vsel %vm102, %v64, %v101
    %vm104 = vcmp.eq.f32.partialorder %v64, 0.0
    %v105 = vand.u32 %v64, 2147483648
    %v106 = vsel %vm104, %v105, %v103
    %v107 = vrsqrt.pop %v67
    %v108 = vmul.f32 %v67, %v107
    %vm109 = vcmp.eq.f32.partialorder %v67, inf
    %v110 = vsel %vm109, %v67, %v108
    %vm111 = vcmp.eq.f32.partialorder %v67, 0.0
    %v112 = vand.u32 %v67, 2147483648
    %v113 = vsel %vm111, %v112, %v110
    %v114 = vrsqrt.pop %v71
    %v115 = vmul.f32 %v71, %v114
    %vm116 = vcmp.eq.f32.partialorder %v71, inf
    %v117 = vsel %vm116, %v71, %v115
    %vm118 = vcmp.eq.f32.partialorder %v71, 0.0
    %v119 = vand.u32 %v71, 2147483648
    %v120 = vsel %vm118, %v119, %v117
    %vm121 = vcmp.gt.f32.partialorder %v78, 1.0
    %vm122 = vcmp.gt.f32.partialorder %v85, 1.0
    %vm123 = vcmp.gt.f32.partialorder %v92, 1.0
    %vm124 = vcmp.gt.f32.partialorder %v99, 1.0
    %vm125 = vcmp.gt.f32.partialorder %v106, 1.0
    %vm126 = vcmp.gt.f32.partialorder %v113, 1.0
    %vm127 = vcmp.gt.f32.partialorder %v120, 1.0
    %v128 = vadd.f32 %v78, 1e-07
    %v129 = vadd.f32 %v85, 1e-07
    %v130 = vadd.f32 %v92, 1e-07
    %v131 = vadd.f32 %v99, 1e-07
    %v132 = vadd.f32 %v106, 1e-07
    %v133 = vadd.f32 %v113, 1e-07
    %v134 = vadd.f32 %v120, 1e-07
    %v135 = vrcp.pop %v128
    %v136 = vmul.f32 1.0, %v135
    %v137 = vrcp.pop %v129
    %v138 = vmul.f32 1.0, %v137
    %v139 = vrcp.pop %v130
    %v140 = vmul.f32 1.0, %v139
    %v141 = vrcp.pop %v131
    %v142 = vmul.f32 1.0, %v141
    %v143 = vrcp.pop %v132
    %v144 = vmul.f32 1.0, %v143
    %v145 = vrcp.pop %v133
    %v146 = vmul.f32 1.0, %v145
    %v147 = vrcp.pop %v134
    %v148 = vmul.f32 1.0, %v147
    %v149 = vsel %vm121, %v136, 1.0
    %v150 = vsel %vm122, %v138, 1.0
    %v151 = vsel %vm123, %v140, 1.0
    %v152 = vsel %vm124, %v142, 1.0
    %v153 = vsel %vm125, %v144, 1.0
    %v154 = vsel %vm126, %v146, 1.0
    %v155 = vsel %vm127, %v148, 1.0
    %v156 = vmul.f32 %v35, %v149
    %v157 = vmul.f32 %v36, %v150
    %v158 = vmul.f32 %v37, %v151
    %v159 = vmul.f32 %v38, %v152
    %v160 = vmul.f32 %v39, %v153
    %v161 = vmul.f32 %v40, %v154
    %v162 = vmul.f32 %v41, %v155
    %v163 = vpack.c.bf16 %v157, %v156
    %v164 = vpack.c.bf16 %v159, %v158
    %v165 = vpack.c.bf16 %v161, %v160
    %v166 = vpack.c.bf16 %v162, %v162
    %v167 = vld [vmem:[%s0] sm:$0xff]
    %v168 = vld [vmem:[%s0 + $0x8] sm:$0xff]
    %v169 = vld [vmem:[%s0 + $0x10] sm:$0xff]
    %v170 = vld [vmem:[%s0 + $0x18] sm:$0xff]
    %v171 = vld [vmem:[%s0 + $0x20] sm:$0xff]
    %v172 = vld [vmem:[%s0 + $0x28] sm:$0xff]
    %v173 = vld [vmem:[%s0 + $0x30] sm:$0xff]
    %v174 = vld [vmem:[%s0 + $0x38] sm:$0xff]
    %v175 = vlaneseq
    %v176 = vand.u32 %v175, 127
    %177 = vset.pattern.permute.xlu0 0
    %178 = vperm.xlu0 %177, %v167
    %v179 = vpop.permute.xlu0 %178
    %180 = vset.pattern.permute.xlu0 0
    %181 = vperm.xlu0 %180, %v168
    %v182 = vpop.permute.xlu0 %181
    %183 = vset.pattern.permute.xlu0 0
    %184 = vperm.xlu0 %183, %v169
    %v185 = vpop.permute.xlu0 %184
    %186 = vset.pattern.permute.xlu0 0
    %187 = vperm.xlu0 %186, %v170
    %v188 = vpop.permute.xlu0 %187
    %189 = vset.pattern.permute.xlu0 0
    %190 = vperm.xlu0 %189, %v171
    %v191 = vpop.permute.xlu0 %190
    %192 = vset.pattern.permute.xlu0 0
    %193 = vperm.xlu0 %192, %v172
    %v194 = vpop.permute.xlu0 %193
    %195 = vset.pattern.permute.xlu0 0
    %196 = vperm.xlu0 %195, %v173
    %v197 = vpop.permute.xlu0 %196
    %198 = vset.pattern.permute.xlu0 0
    %199 = vperm.xlu0 %198, %v174
    %v200 = vpop.permute.xlu0 %199
    %vm201 = vcmp.eq.s32.totalorder %v179, %v176
    %vm202 = vcmp.eq.s32.totalorder %v182, %v176
    %vm203 = vcmp.eq.s32.totalorder %v185, %v176
    %vm204 = vcmp.eq.s32.totalorder %v188, %v176
    %vm205 = vcmp.eq.s32.totalorder %v191, %v176
    %vm206 = vcmp.eq.s32.totalorder %v194, %v176
    %vm207 = vcmp.eq.s32.totalorder %v197, %v176
    %vm208 = vcmp.eq.s32.totalorder %v200, %v176
    %v209 = vsel %vm201, 1, 0
    %v210 = vsel %vm202, 1, 0
    %v211 = vsel %vm203, 1, 0
    %v212 = vsel %vm204, 1, 0
    %v213 = vsel %vm205, 1, 0
    %v214 = vsel %vm206, 1, 0
    %v215 = vsel %vm207, 1, 0
    %v216 = vsel %vm208, 1, 0
    %v217 = vcvt.s32.f32 %v209
    %v218 = vcvt.s32.f32 %v210
    %v219 = vcvt.s32.f32 %v211
    %v220 = vcvt.s32.f32 %v212
    %v221 = vcvt.s32.f32 %v213
    %v222 = vcvt.s32.f32 %v214
    %v223 = vcvt.s32.f32 %v215
    %v224 = vcvt.s32.f32 %v216
    %v225 = vpack.c.bf16 %v218, %v217
    %v226 = vpack.c.bf16 %v220, %v219
    %v227 = vpack.c.bf16 %v222, %v221
    %v228 = vpack.c.bf16 %v224, %v223
    %vm229 = vcmask 416768
    %v231 = vsel %vm229, %v225, 0
    %v234 = vsel %vm229, %v226, 0
    %v237 = vsel %vm229, %v227, 0
    %v240 = vsel %vm229, %v228, 0
    %vm242 = vcmask 1040384
    %vm243 = vcmask 1041408
    %v244 = vsel %vm242, 4294967295, 65535
    %v245 = vsel %vm243, %v244, 0
    %v247 = vand.u32 %v166, %v245
    %249 = vmatprep.subr.bf16.mxu0 0
    %250 = vmatpush1.bf16.msra.mxu0 %v163
    %251 = vmatprep.subr.bf16.mxu0 0
    %252 = vmatpush1.bf16.msra.mxu0 %v164
    %253 = vmatprep.subr.bf16.mxu0 0
    %254 = vmatpush1.bf16.msra.mxu0 %v165
    %255 = vmatprep.subr.bf16.mxu0 0
    %256 = vmatpush1.bf16.msra.mxu0 %v247
    %257 = vmatprep.subr.bf16.mxu0 0
    %258 = vmatpush1.bf16.msra.mxu0 0
    %259 = vmatprep.subr.bf16.mxu0 0
    %260 = vmatpush1.bf16.msra.mxu0 0
    %261 = vmatprep.subr.bf16.mxu0 0
    %262 = vmatpush1.bf16.msra.mxu0 0
    %263 = vmatprep.subr.bf16.mxu0 0
    %264 = vmatpush1.bf16.msra.mxu0 0
    %265 = vmatprep.subr.bf16.mxu0 0
    %266 = vmatpush1.bf16.msra.mxu0 0
    %267 = vmatprep.subr.bf16.mxu0 0
    %268 = vmatpush1.bf16.msra.mxu0 0
    %269 = vmatprep.subr.bf16.mxu0 0
    %270 = vmatpush1.bf16.msra.mxu0 0
    %271 = vmatprep.subr.bf16.mxu0 0
    %272 = vmatpush1.bf16.msra.mxu0 0
    %273 = vmatprep.subr.bf16.mxu0 0
    %274 = vmatpush1.bf16.msra.mxu0 0
    %275 = vmatprep.subr.bf16.mxu0 0
    %276 = vmatpush1.bf16.msra.mxu0 0
    %277 = vmatprep.subr.bf16.mxu0 0
    %278 = vmatpush1.bf16.msra.mxu0 0
    %279 = vmatprep.subr.bf16.mxu0 0
    %280 = vmatpush1.bf16.msra.mxu0 0
    %281 = vmatprep.mubr.bf16.mxu0 0
    %282 = vmatmul.mubr.bf16.gmra.mrb[0].mxu0 %v231
    %v283 = vpop.f32.mrb[0].mxu0
    %v284 = vadd.f32 0.0, %v283
    %v285 = vpop.f32.mrb[0].mxu0
    %v286 = vpop.f32.mrb[0].mxu0
    %v287 = vadd.f32 0.0, %v286
    %v288 = vpop.f32.mrb[0].mxu0
    %289 = vmatprep.mubr.bf16.mxu0 0
    %290 = vmatmul.mubr.bf16.gmra.mrb[0].mxu0 %v234
    %v291 = vpop.f32.mrb[0].mxu0
    %v292 = vadd.f32 0.0, %v291
    %v293 = vpop.f32.mrb[0].mxu0
    %v294 = vpop.f32.mrb[0].mxu0
    %v295 = vadd.f32 0.0, %v294
    %v296 = vpop.f32.mrb[0].mxu0
    %297 = vmatprep.mubr.bf16.mxu0 0
    %298 = vmatmul.mubr.bf16.gmra.mrb[0].mxu0 %v237
    %v299 = vpop.f32.mrb[0].mxu0
    %v300 = vadd.f32 0.0, %v299
    %v301 = vpop.f32.mrb[0].mxu0
    %v302 = vpop.f32.mrb[0].mxu0
    %v303 = vadd.f32 0.0, %v302
    %v304 = vpop.f32.mrb[0].mxu0
    %305 = vmatprep.mubr.bf16.mxu0 0
    %306 = vmatmul.mubr.bf16.gmra.mrb[0].mxu0 %v240
    %v307 = vpop.f32.mrb[0].mxu0
    %v308 = vadd.f32 0.0, %v307
    %v309 = vpop.f32.mrb[0].mxu0
    %v310 = vpop.f32.mrb[0].mxu0
    %v311 = vadd.f32 0.0, %v310
    %v312 = vpop.f32.mrb[0].mxu0
    %313 = vdwg.mxu0
    %v314 = vpack.c.bf16 %v287, %v284
    %v315 = vpack.c.bf16 %v295, %v292
    %v316 = vpack.c.bf16 %v303, %v300
    %v317 = vpack.c.bf16 %v311, %v308
    %v318 = vld [vmem:[%s2] sm:$0xff]
    %v319 = vld [vmem:[%s2 + $0x8] sm:$0xff]
    %v320 = vld [vmem:[%s2 + $0x10] sm:$0xff]
    %v321 = vld [vmem:[%s2 + $0x18] sm:$0xff]
    %v322 = vld [vmem:[%s2 + $0x20] sm:$0xff]
    %v323 = vld [vmem:[%s2 + $0x28] sm:$0xff]
    %v324 = vld [vmem:[%s2 + $0x30] sm:$0xff]
    %v325 = vld [vmem:[%s2 + $0x38] sm:$0xff]
    %v326 = vld [vmem:[%s4] sm:$0xf]
    %v328 = vlaneseq
    %v329 = vshrl.u32 %v328, 7
    %v330 = vsub.s32 0, %v329
    %v331 = vrot.slane %v326, %v330
    %v332 = vlaneseq
    %v333 = vshrl.u32 %v332, 7
    %v334 = vsub.s32 1, %v333
    %v335 = vrot.slane %v326, %v334
    %v336 = vlaneseq
    %v337 = vshrl.u32 %v336, 7
    %v338 = vsub.s32 2, %v337
    %v339 = vrot.slane %v326, %v338
    %v340 = vlaneseq
    %v341 = vshrl.u32 %v340, 7
    %v342 = vsub.s32 3, %v341
    %v343 = vrot.slane %v326, %v342
    %v356 = vunpack.c.l.b16 %v318
    %v357 = vunpack.c.h.b16 %v318
    %v358 = vunpack.c.l.b16 %v319
    %v359 = vunpack.c.h.b16 %v319
    %v360 = vunpack.c.l.b16 %v320
    %v361 = vunpack.c.h.b16 %v320
    %v362 = vunpack.c.l.b16 %v321
    %v363 = vunpack.c.h.b16 %v321
    %v364 = vunpack.c.l.b16 %v322
    %v365 = vunpack.c.h.b16 %v322
    %v366 = vunpack.c.l.b16 %v323
    %v367 = vunpack.c.h.b16 %v323
    %v368 = vunpack.c.l.b16 %v324
    %v369 = vunpack.c.h.b16 %v324
    %v370 = vunpack.c.l.b16 %v325
    %v371 = vunpack.c.h.b16 %v325
    %v372 = vpack.c.b16 %v360, %v356
    %v373 = vpack.c.b16 %v361, %v357
    %v374 = vpack.c.b16 %v362, %v358
    %v375 = vpack.c.b16 %v363, %v359
    %v376 = vpack.c.b16 %v368, %v364
    %v377 = vpack.c.b16 %v369, %v365
    %v378 = vpack.c.b16 %v370, %v366
    %v379 = vpack.c.b16 %v371, %v367
    %v389 = vsel %vm49, %v314, 0
    %v392 = vsel %vm49, %v315, 0
    %v395 = vsel %vm49, %v316, 0
    %v398 = vsel %vm49, %v317, 0
    %400 = vmatprep.subr.bf16.mxu0 %v373
    %401 = vmatpush1.bf16.msra.mxu0 %v372
    %402 = vmatprep.subr.bf16.mxu0 %v377
    %403 = vmatpush1.bf16.msra.mxu0 %v376
    %404 = vmatprep.subr.bf16.mxu0 0
    %405 = vmatpush1.bf16.msra.mxu0 0
    %406 = vmatprep.subr.bf16.mxu0 0
    %407 = vmatpush1.bf16.msra.mxu0 0
    %408 = vmatprep.subr.bf16.mxu0 0
    %409 = vmatpush1.bf16.msra.mxu0 0
    %410 = vmatprep.subr.bf16.mxu0 0
    %411 = vmatpush1.bf16.msra.mxu0 0
    %412 = vmatprep.subr.bf16.mxu0 0
    %413 = vmatpush1.bf16.msra.mxu0 0
    %414 = vmatprep.subr.bf16.mxu0 0
    %415 = vmatpush1.bf16.msra.mxu0 0
    %416 = vmatprep.subr.bf16.mxu0 0
    %417 = vmatpush1.bf16.msra.mxu0 0
    %418 = vmatprep.subr.bf16.mxu0 0
    %419 = vmatpush1.bf16.msra.mxu0 0
    %420 = vmatprep.subr.bf16.mxu0 0
    %421 = vmatpush1.bf16.msra.mxu0 0
    %422 = vmatprep.subr.bf16.mxu0 0
    %423 = vmatpush1.bf16.msra.mxu0 0
    %424 = vmatprep.subr.bf16.mxu0 0
    %425 = vmatpush1.bf16.msra.mxu0 0
    %426 = vmatprep.subr.bf16.mxu0 0
    %427 = vmatpush1.bf16.msra.mxu0 0
    %428 = vmatprep.subr.bf16.mxu0 0
    %429 = vmatpush1.bf16.msra.mxu0 0
    %430 = vmatprep.subr.bf16.mxu0 0
    %431 = vmatpush1.bf16.msra.mxu0 0
    %432 = vmatprep.mubr.bf16.mxu0 0
    %433 = vmatmul.mubr.bf16.gmra.mrb[0].mxu0 %v389
    %v434 = vpop.f32.mrb[0].mxu0
    %v435 = vadd.f32 %v331, %v434
    %v436 = vpop.f32.mrb[0].mxu0
    %v437 = vadd.f32 %v335, %v436
    %v438 = vpop.f32.mrb[0].mxu0
    %v439 = vadd.f32 %v331, %v438
    %v440 = vpop.f32.mrb[0].mxu0
    %v441 = vadd.f32 %v335, %v440
    %442 = vmatprep.mubr.bf16.mxu0 0
    %443 = vmatmul.mubr.bf16.gmra.mrb[0].mxu0 %v392
    %v444 = vpop.f32.mrb[0].mxu0
    %v445 = vadd.f32 %v331, %v444
    %v446 = vpop.f32.mrb[0].mxu0
    %v447 = vadd.f32 %v335, %v446
    %v448 = vpop.f32.mrb[0].mxu0
    %v449 = vadd.f32 %v331, %v448
    %v450 = vpop.f32.mrb[0].mxu0
    %v451 = vadd.f32 %v335, %v450
    %452 = vmatprep.mubr.bf16.mxu0 0
    %453 = vmatmul.mubr.bf16.gmra.mrb[0].mxu0 %v395
    %v454 = vpop.f32.mrb[0].mxu0
    %v455 = vadd.f32 %v331, %v454
    %v456 = vpop.f32.mrb[0].mxu0
    %v457 = vadd.f32 %v335, %v456
    %v458 = vpop.f32.mrb[0].mxu0
    %v459 = vadd.f32 %v331, %v458
    %v460 = vpop.f32.mrb[0].mxu0
    %v461 = vadd.f32 %v335, %v460
    %462 = vmatprep.mubr.bf16.mxu0 0
    %463 = vmatmul.mubr.bf16.gmra.mrb[0].mxu0 %v398
    %v464 = vpop.f32.mrb[0].mxu0
    %v465 = vadd.f32 %v331, %v464
    %v466 = vpop.f32.mrb[0].mxu0
    %v467 = vadd.f32 %v335, %v466
    %v468 = vpop.f32.mrb[0].mxu0
    %v469 = vadd.f32 %v331, %v468
    %v470 = vpop.f32.mrb[0].mxu0
    %v471 = vadd.f32 %v335, %v470
    %472 = vdwg.mxu0
    %473 = vmatprep.subr.bf16.mxu0 %v375
    %474 = vmatpush1.bf16.msra.mxu0 %v374
    %475 = vmatprep.subr.bf16.mxu0 %v379
    %476 = vmatpush1.bf16.msra.mxu0 %v378
    %477 = vmatprep.subr.bf16.mxu0 0
    %478 = vmatpush1.bf16.msra.mxu0 0
    %479 = vmatprep.subr.bf16.mxu0 0
    %480 = vmatpush1.bf16.msra.mxu0 0
    %481 = vmatprep.subr.bf16.mxu0 0
    %482 = vmatpush1.bf16.msra.mxu0 0
    %483 = vmatprep.subr.bf16.mxu0 0
    %484 = vmatpush1.bf16.msra.mxu0 0
    %485 = vmatprep.subr.bf16.mxu0 0
    %486 = vmatpush1.bf16.msra.mxu0 0
    %487 = vmatprep.subr.bf16.mxu0 0
    %488 = vmatpush1.bf16.msra.mxu0 0
    %489 = vmatprep.subr.bf16.mxu0 0
    %490 = vmatpush1.bf16.msra.mxu0 0
    %491 = vmatprep.subr.bf16.mxu0 0
    %492 = vmatpush1.bf16.msra.mxu0 0
    %493 = vmatprep.subr.bf16.mxu0 0
    %494 = vmatpush1.bf16.msra.mxu0 0
    %495 = vmatprep.subr.bf16.mxu0 0
    %496 = vmatpush1.bf16.msra.mxu0 0
    %497 = vmatprep.subr.bf16.mxu0 0
    %498 = vmatpush1.bf16.msra.mxu0 0
    %499 = vmatprep.subr.bf16.mxu0 0
    %500 = vmatpush1.bf16.msra.mxu0 0
    %501 = vmatprep.subr.bf16.mxu0 0
    %502 = vmatpush1.bf16.msra.mxu0 0
    %503 = vmatprep.subr.bf16.mxu0 0
    %504 = vmatpush1.bf16.msra.mxu0 0
    %505 = vmatprep.mubr.bf16.mxu0 0
    %506 = vmatmul.mubr.bf16.gmra.mrb[0].mxu0 %v389
    %v507 = vpop.f32.mrb[0].mxu0
    %v508 = vadd.f32 %v339, %v507
    %v509 = vpop.f32.mrb[0].mxu0
    %v510 = vadd.f32 %v343, %v509
    %v511 = vpop.f32.mrb[0].mxu0
    %v512 = vadd.f32 %v339, %v511
    %v513 = vpop.f32.mrb[0].mxu0
    %v514 = vadd.f32 %v343, %v513
    %515 = vmatprep.mubr.bf16.mxu0 0
    %516 = vmatmul.mubr.bf16.gmra.mrb[0].mxu0 %v392
    %v517 = vpop.f32.mrb[0].mxu0
    %v518 = vadd.f32 %v339, %v517
    %v519 = vpop.f32.mrb[0].mxu0
    %v520 = vadd.f32 %v343, %v519
    %v521 = vpop.f32.mrb[0].mxu0
    %v522 = vadd.f32 %v339, %v521
    %v523 = vpop.f32.mrb[0].mxu0
    %v524 = vadd.f32 %v343, %v523
    %525 = vmatprep.mubr.bf16.mxu0 0
    %526 = vmatmul.mubr.bf16.gmra.mrb[0].mxu0 %v395
    %v527 = vpop.f32.mrb[0].mxu0
    %v528 = vadd.f32 %v339, %v527
    %v529 = vpop.f32.mrb[0].mxu0
    %v530 = vadd.f32 %v343, %v529
    %v531 = vpop.f32.mrb[0].mxu0
    %v532 = vadd.f32 %v339, %v531
    %v533 = vpop.f32.mrb[0].mxu0
    %v534 = vadd.f32 %v343, %v533
    %535 = vmatprep.mubr.bf16.mxu0 0
    %536 = vmatmul.mubr.bf16.gmra.mrb[0].mxu0 %v398
    %v537 = vpop.f32.mrb[0].mxu0
    %v538 = vadd.f32 %v339, %v537
    %v539 = vpop.f32.mrb[0].mxu0
    %v540 = vadd.f32 %v343, %v539
    %v541 = vpop.f32.mrb[0].mxu0
    %v542 = vadd.f32 %v339, %v541
    %v543 = vpop.f32.mrb[0].mxu0
    %v544 = vadd.f32 %v343, %v543
    %545 = vdwg.mxu0
    %546 = vst [vmem:[#allocation2] sm:$0xff] %v435
    %547 = vst [vmem:[#allocation2 + $0x8] sm:$0xff] %v437
    %548 = vst [vmem:[#allocation2 + $0x10] sm:$0xff] %v508
    %549 = vst [vmem:[#allocation2 + $0x18] sm:$0xff] %v510
    %550 = vst [vmem:[#allocation2 + $0x20] sm:$0xff] %v439
    %551 = vst [vmem:[#allocation2 + $0x28] sm:$0xff] %v441
    %552 = vst [vmem:[#allocation2 + $0x30] sm:$0xff] %v512
    %553 = vst [vmem:[#allocation2 + $0x38] sm:$0xff] %v514
    %554 = vst [vmem:[#allocation2 + $0x40] sm:$0xff] %v445
    %555 = vst [vmem:[#allocation2 + $0x48] sm:$0xff] %v447
    %556 = vst [vmem:[#allocation2 + $0x50] sm:$0xff] %v518
    %557 = vst [vmem:[#allocation2 + $0x58] sm:$0xff] %v520
    %558 = vst [vmem:[#allocation2 + $0x60] sm:$0xff] %v449
    %559 = vst [vmem:[#allocation2 + $0x68] sm:$0xff] %v451
    %560 = vst [vmem:[#allocation2 + $0x70] sm:$0xff] %v522
    %561 = vst [vmem:[#allocation2 + $0x78] sm:$0xff] %v524
    %562 = vst [vmem:[#allocation2 + $0x80] sm:$0xff] %v455
    %563 = vst [vmem:[#allocation2 + $0x88] sm:$0xff] %v457
    %564 = vst [vmem:[#allocation2 + $0x90] sm:$0xff] %v528
    %565 = vst [vmem:[#allocation2 + $0x98] sm:$0xff] %v530
    %566 = vst [vmem:[#allocation2 + $0xa0] sm:$0xff] %v459
    %567 = vst [vmem:[#allocation2 + $0xa8] sm:$0xff] %v461
    %568 = vst [vmem:[#allocation2 + $0xb0] sm:$0xff] %v532
    %569 = vst [vmem:[#allocation2 + $0xb8] sm:$0xff] %v534
    %570 = vst [vmem:[#allocation2 + $0xc0] sm:$0xff] %v465
    %571 = vst [vmem:[#allocation2 + $0xc8] sm:$0xff] %v467
    %572 = vst [vmem:[#allocation2 + $0xd0] sm:$0xff] %v538
    %573 = vst [vmem:[#allocation2 + $0xd8] sm:$0xff] %v540
    %574 = vst [vmem:[#allocation2 + $0xe0] sm:$0xff] %v469
    %575 = vst [vmem:[#allocation2 + $0xe8] sm:$0xff] %v471
    %576 = vst [vmem:[#allocation2 + $0xf0] sm:$0xff] %v542
    %577 = vst [vmem:[#allocation2 + $0xf8] sm:$0xff] %v544
    %v578 = vld [vmem:[#allocation2] sm:$0xff]
    %v579 = vld [vmem:[#allocation2 + $0x8] sm:$0xff]
    %v580 = vld [vmem:[#allocation2 + $0x10] sm:$0xff]
    %v581 = vld [vmem:[#allocation2 + $0x18] sm:$0xff]
    %v582 = vld [vmem:[#allocation3] sm:$0xff]
    %v583 = vld [vmem:[#allocation3 + $0x8] sm:$0xff]
    %v584 = vld [vmem:[#allocation3 + $0x10] sm:$0xff]
    %v585 = vld [vmem:[#allocation3 + $0x18] sm:$0xff]
    %v586 = vld [vmem:[#allocation3 + $0x20] sm:$0xff]
    %v587 = vld [vmem:[#allocation3 + $0x28] sm:$0xff]
    %v588 = vld [vmem:[#allocation3 + $0x30] sm:$0xff]
    %v589 = vld [vmem:[#allocation3 + $0x38] sm:$0xff]
    %v590 = vld [vmem:[#allocation3 + $0x40] sm:$0xff]
    %v591 = vld [vmem:[#allocation3 + $0x48] sm:$0xff]
    %v592 = vld [vmem:[#allocation3 + $0x50] sm:$0xff]
    %v593 = vld [vmem:[#allocation3 + $0x58] sm:$0xff]
    %v594 = vld [vmem:[#allocation3 + $0x60] sm:$0xff]
    %v595 = vld [vmem:[#allocation3 + $0x68] sm:$0xff]
    %v596 = vld [vmem:[#allocation3 + $0x70] sm:$0xff]
    %v597 = vld [vmem:[#allocation3 + $0x78] sm:$0xff]
    %v598 = vld [vmem:[#allocation3 + $0x80] sm:$0xff]
    %v599 = vld [vmem:[#allocation3 + $0x88] sm:$0xff]
    %v600 = vld [vmem:[#allocation3 + $0x90] sm:$0xff]
    %v601 = vld [vmem:[#allocation3 + $0x98] sm:$0xff]
    %v602 = vld [vmem:[#allocation3 + $0xa0] sm:$0xff]
    %v603 = vld [vmem:[#allocation3 + $0xa8] sm:$0xff]
    %v604 = vld [vmem:[#allocation3 + $0xb0] sm:$0xff]
    %v605 = vld [vmem:[#allocation3 + $0xb8] sm:$0xff]
    %v606 = vld [vmem:[#allocation3 + $0xc0] sm:$0xff]
    %v607 = vld [vmem:[#allocation3 + $0xc8] sm:$0xff]
    %v608 = vld [vmem:[#allocation3 + $0xd0] sm:$0xff]
    %v609 = vld [vmem:[#allocation3 + $0xd8] sm:$0xff]
    %v610 = vld [vmem:[#allocation3 + $0xe0] sm:$0xff]
    %v611 = vld [vmem:[#allocation3 + $0xe8] sm:$0xff]
    %v612 = vld [vmem:[#allocation3 + $0xf0] sm:$0xff]
    %v613 = vld [vmem:[#allocation3 + $0xf8] sm:$0xff]
    %v646 = vunpack.c.l.b16 %v582
    %v647 = vunpack.c.h.b16 %v582
    %v648 = vunpack.c.l.b16 %v583
    %v649 = vunpack.c.h.b16 %v583
    %v650 = vunpack.c.l.b16 %v584
    %v651 = vunpack.c.h.b16 %v584
    %v652 = vunpack.c.l.b16 %v585
    %v653 = vunpack.c.h.b16 %v585
    %v654 = vunpack.c.l.b16 %v586
    %v655 = vunpack.c.h.b16 %v586
    %v656 = vunpack.c.l.b16 %v587
    %v657 = vunpack.c.h.b16 %v587
    %v658 = vunpack.c.l.b16 %v588
    %v659 = vunpack.c.h.b16 %v588
    %v660 = vunpack.c.l.b16 %v589
    %v661 = vunpack.c.h.b16 %v589
    %v662 = vunpack.c.l.b16 %v590
    %v663 = vunpack.c.h.b16 %v590
    %v664 = vunpack.c.l.b16 %v591
    %v665 = vunpack.c.h.b16 %v591
    %v666 = vunpack.c.l.b16 %v592
    %v667 = vunpack.c.h.b16 %v592
    %v668 = vunpack.c.l.b16 %v593
    %v669 = vunpack.c.h.b16 %v593
    %v670 = vunpack.c.l.b16 %v594
    %v671 = vunpack.c.h.b16 %v594
    %v672 = vunpack.c.l.b16 %v595
    %v673 = vunpack.c.h.b16 %v595
    %v674 = vunpack.c.l.b16 %v596
    %v675 = vunpack.c.h.b16 %v596
    %v676 = vunpack.c.l.b16 %v597
    %v677 = vunpack.c.h.b16 %v597
    %v678 = vunpack.c.l.b16 %v598
    %v679 = vunpack.c.h.b16 %v598
    %v680 = vunpack.c.l.b16 %v599
    %v681 = vunpack.c.h.b16 %v599
    %v682 = vunpack.c.l.b16 %v600
    %v683 = vunpack.c.h.b16 %v600
    %v684 = vunpack.c.l.b16 %v601
    %v685 = vunpack.c.h.b16 %v601
    %v686 = vunpack.c.l.b16 %v602
    %v687 = vunpack.c.h.b16 %v602
    %v688 = vunpack.c.l.b16 %v603
    %v689 = vunpack.c.h.b16 %v603
    %v690 = vunpack.c.l.b16 %v604
    %v691 = vunpack.c.h.b16 %v604
    %v692 = vunpack.c.l.b16 %v605
    %v693 = vunpack.c.h.b16 %v605
    %v694 = vunpack.c.l.b16 %v606
    %v695 = vunpack.c.h.b16 %v606
    %v696 = vunpack.c.l.b16 %v607
    %v697 = vunpack.c.h.b16 %v607
    %v698 = vunpack.c.l.b16 %v608
    %v699 = vunpack.c.h.b16 %v608
    %v700 = vunpack.c.l.b16 %v609
    %v701 = vunpack.c.h.b16 %v609
    %v702 = vunpack.c.l.b16 %v610
    %v703 = vunpack.c.h.b16 %v610
    %v704 = vunpack.c.l.b16 %v611
    %v705 = vunpack.c.h.b16 %v611
    %v706 = vunpack.c.l.b16 %v612
    %v707 = vunpack.c.h.b16 %v612
    %v708 = vunpack.c.l.b16 %v613
    %v709 = vunpack.c.h.b16 %v613
    %v710 = vpack.c.b16 %v650, %v646
    %v711 = vpack.c.b16 %v651, %v647
    %v712 = vpack.c.b16 %v652, %v648
    %v713 = vpack.c.b16 %v653, %v649
    %v714 = vpack.c.b16 %v658, %v654
    %v715 = vpack.c.b16 %v659, %v655
    %v716 = vpack.c.b16 %v660, %v656
    %v717 = vpack.c.b16 %v661, %v657
    %v718 = vpack.c.b16 %v666, %v662
    %v719 = vpack.c.b16 %v667, %v663
    %v720 = vpack.c.b16 %v668, %v664
    %v721 = vpack.c.b16 %v669, %v665
    %v722 = vpack.c.b16 %v674, %v670
    %v723 = vpack.c.b16 %v675, %v671
    %v724 = vpack.c.b16 %v676, %v672
    %v725 = vpack.c.b16 %v677, %v673
    %v726 = vpack.c.b16 %v682, %v678
    %v727 = vpack.c.b16 %v683, %v679
    %v728 = vpack.c.b16 %v684, %v680
    %v729 = vpack.c.b16 %v685, %v681
    %v730 = vpack.c.b16 %v690, %v686
    %v731 = vpack.c.b16 %v691, %v687
    %v732 = vpack.c.b16 %v692, %v688
    %v733 = vpack.c.b16 %v693, %v689
    %v734 = vpack.c.b16 %v698, %v694
    %v735 = vpack.c.b16 %v699, %v695
    %v736 = vpack.c.b16 %v700, %v696
    %v737 = vpack.c.b16 %v701, %v697
    %v738 = vpack.c.b16 %v706, %v702
    %v739 = vpack.c.b16 %v707, %v703
    %v740 = vpack.c.b16 %v708, %v704
    %v741 = vpack.c.b16 %v709, %v705
    %774 = vmatprep.subr.bf16.mxu0 %v711
    %775 = vmatpush1.bf16.msra.mxu0 %v710
    %776 = vmatprep.subr.bf16.mxu0 %v715
    %777 = vmatpush1.bf16.msra.mxu0 %v714
    %778 = vmatprep.subr.bf16.mxu0 %v719
    %779 = vmatpush1.bf16.msra.mxu0 %v718
    %780 = vmatprep.subr.bf16.mxu0 %v723
    %781 = vmatpush1.bf16.msra.mxu0 %v722
    %782 = vmatprep.subr.bf16.mxu0 %v727
    %783 = vmatpush1.bf16.msra.mxu0 %v726
    %784 = vmatprep.subr.bf16.mxu0 %v731
    %785 = vmatpush1.bf16.msra.mxu0 %v730
    %786 = vmatprep.subr.bf16.mxu0 %v735
    %787 = vmatpush1.bf16.msra.mxu0 %v734
    %788 = vmatprep.subr.bf16.mxu0 %v739
    %789 = vmatpush1.bf16.msra.mxu0 %v738
    %790 = vmatprep.subr.bf16.mxu0 0
    %791 = vmatpush1.bf16.msra.mxu0 0
    %792 = vmatprep.subr.bf16.mxu0 0
    %793 = vmatpush1.bf16.msra.mxu0 0
    %794 = vmatprep.subr.bf16.mxu0 0
    %795 = vmatpush1.bf16.msra.mxu0 0
    %796 = vmatprep.subr.bf16.mxu0 0
    %797 = vmatpush1.bf16.msra.mxu0 0
    %798 = vmatprep.subr.bf16.mxu0 0
    %799 = vmatpush1.bf16.msra.mxu0 0
    %800 = vmatprep.subr.bf16.mxu0 0
    %801 = vmatpush1.bf16.msra.mxu0 0
    %802 = vmatprep.subr.bf16.mxu0 0
    %803 = vmatpush1.bf16.msra.mxu0 0
    %804 = vmatprep.subr.bf16.mxu0 0
    %805 = vmatpush1.bf16.msra.mxu0 0
    %806 = vmatprep.mubr.bf16.mxu0 0
    %807 = vmatmul.mubr.bf16.gmra.mrb[0].mxu0 0
    %v808 = vpop.f32.mrb[0].mxu0
    %v809 = vadd.f32 0.0, %v808
    %v810 = vpop.f32.mrb[0].mxu0
    %v811 = vadd.f32 0.0, %v810
    %v812 = vpop.f32.mrb[0].mxu0
    %v813 = vpop.f32.mrb[0].mxu0
    %814 = vdwg.mxu0
    %815 = vmatprep.subr.bf16.mxu0 %v713
    %816 = vmatpush1.bf16.msra.mxu0 %v712
    %817 = vmatprep.subr.bf16.mxu0 %v717
    %818 = vmatpush1.bf16.msra.mxu0 %v716
    %819 = vmatprep.subr.bf16.mxu0 %v721
    %820 = vmatpush1.bf16.msra.mxu0 %v720
    %821 = vmatprep.subr.bf16.mxu0 %v725
    %822 = vmatpush1.bf16.msra.mxu0 %v724
    %823 = vmatprep.subr.bf16.mxu0 %v729
    %824 = vmatpush1.bf16.msra.mxu0 %v728
    %825 = vmatprep.subr.bf16.mxu0 %v733
    %826 = vmatpush1.bf16.msra.mxu0 %v732
    %827 = vmatprep.subr.bf16.mxu0 %v737
    %828 = vmatpush1.bf16.msra.mxu0 %v736
    %829 = vmatprep.subr.bf16.mxu0 %v741
    %830 = vmatpush1.bf16.msra.mxu0 %v740
    %831 = vmatprep.subr.bf16.mxu0 0
    %832 = vmatpush1.bf16.msra.mxu0 0
    %833 = vmatprep.subr.bf16.mxu0 0
    %834 = vmatpush1.bf16.msra.mxu0 0
    %835 = vmatprep.subr.bf16.mxu0 0
    %836 = vmatpush1.bf16.msra.mxu0 0
    %837 = vmatprep.subr.bf16.mxu0 0
    %838 = vmatpush1.bf16.msra.mxu0 0
    %839 = vmatprep.subr.bf16.mxu0 0
    %840 = vmatpush1.bf16.msra.mxu0 0
    %841 = vmatprep.subr.bf16.mxu0 0
    %842 = vmatpush1.bf16.msra.mxu0 0
    %843 = vmatprep.subr.bf16.mxu0 0
    %844 = vmatpush1.bf16.msra.mxu0 0
    %845 = vmatprep.subr.bf16.mxu0 0
    %846 = vmatpush1.bf16.msra.mxu0 0
    %847 = vmatprep.mubr.bf16.mxu0 0
    %848 = vmatmul.mubr.bf16.gmra.mrb[0].mxu0 0
    %v849 = vpop.f32.mrb[0].mxu0
    %v850 = vadd.f32 0.0, %v849
    %v851 = vpop.f32.mrb[0].mxu0
    %v852 = vadd.f32 0.0, %v851
    %v853 = vpop.f32.mrb[0].mxu0
    %v854 = vpop.f32.mrb[0].mxu0
    %855 = vdwg.mxu0
    %v856 = vadd.f32 %v578, %v809
    %v857 = vadd.f32 %v579, %v811
    %v858 = vadd.f32 %v580, %v850
    %v859 = vadd.f32 %v581, %v852
    %v860 = vxor.u32 %v856, 2147483648
    %v861 = vmul.f32 %v860, 1.442695
    %v862 = vpow.pop %v861
    %v863 = vadd.f32 %v862, 1.0
    %v864 = vrcp.pop %v863
    %v865 = vmul.f32 1.0, %v864
    %v866 = vxor.u32 %v857, 2147483648
    %v867 = vmul.f32 %v866, 1.442695
    %v868 = vpow.pop %v867
    %v869 = vadd.f32 %v868, 1.0
    %v870 = vrcp.pop %v869
    %v871 = vmul.f32 1.0, %v870
    %v872 = vtanh.pop %v858
    %v873 = vxor.u32 %v859, 2147483648
    %v874 = vmul.f32 %v873, 1.442695
    %v875 = vpow.pop %v874
    %v876 = vadd.f32 %v875, 1.0
    %v877 = vrcp.pop %v876
    %v878 = vmul.f32 1.0, %v877
    %v879 = vmul.f32 %v871, 0.0
    %v880 = vmul.f32 %v865, %v872
    %v881 = vadd.f32 %v879, %v880
    %v882 = vtanh.pop %v881
    %v883 = vmul.f32 %v878, %v882
    %v884 = vld [vmem:[#allocation2 + $0x20] sm:$0xff]
    %v885 = vld [vmem:[#allocation2 + $0x28] sm:$0xff]
    %v886 = vld [vmem:[#allocation2 + $0x30] sm:$0xff]
    %v887 = vld [vmem:[#allocation2 + $0x38] sm:$0xff]
    %v888 = vpack.c.bf16 %v883, %v883
    %889 = vmatprep.subr.bf16.mxu0 %v711
    %890 = vmatpush1.bf16.msra.mxu0 %v710
    %891 = vmatprep.subr.bf16.mxu0 %v715
    %892 = vmatpush1.bf16.msra.mxu0 %v714
    %893 = vmatprep.subr.bf16.mxu0 %v719
    %894 = vmatpush1.bf16.msra.mxu0 %v718
    %895 = vmatprep.subr.bf16.mxu0 %v723
    %896 = vmatpush1.bf16.msra.mxu0 %v722
    %897 = vmatprep.subr.bf16.mxu0 %v727
    %898 = vmatpush1.bf16.msra.mxu0 %v726
    %899 = vmatprep.subr.bf16.mxu0 %v731
    %900 = vmatpush1.bf16.msra.mxu0 %v730
    %901 = vmatprep.subr.bf16.mxu0 %v735
    %902 = vmatpush1.bf16.msra.mxu0 %v734
    %903 = vmatprep.subr.bf16.mxu0 %v739
    %904 = vmatpush1.bf16.msra.mxu0 %v738
    %905 = vmatprep.subr.bf16.mxu0 0
    %906 = vmatpush1.bf16.msra.mxu0 0
    %907 = vmatprep.subr.bf16.mxu0 0
    %908 = vmatpush1.bf16.msra.mxu0 0
    %909 = vmatprep.subr.bf16.mxu0 0
    %910 = vmatpush1.bf16.msra.mxu0 0
    %911 = vmatprep.subr.bf16.mxu0 0
    %912 = vmatpush1.bf16.msra.mxu0 0
    %913 = vmatprep.subr.bf16.mxu0 0
    %914 = vmatpush1.bf16.msra.mxu0 0
    %915 = vmatprep.subr.bf16.mxu0 0
    %916 = vmatpush1.bf16.msra.mxu0 0
    %917 = vmatprep.subr.bf16.mxu0 0
    %918 = vmatpush1.bf16.msra.mxu0 0
    %919 = vmatprep.subr.bf16.mxu0 0
    %920 = vmatpush1.bf16.msra.mxu0 0
    %921 = vmatprep.mubr.bf16.mxu0 0
    %922 = vmatmul.mubr.bf16.gmra.mrb[0].mxu0 %v888
    %v923 = vpop.f32.mrb[0].mxu0
    %v924 = vadd.f32 0.0, %v923
    %v925 = vpop.f32.mrb[0].mxu0
    %v926 = vadd.f32 0.0, %v925
    %v927 = vpop.f32.mrb[0].mxu0
    %v928 = vpop.f32.mrb[0].mxu0
    %929 = vdwg.mxu0
    %930 = vmatprep.subr.bf16.mxu0 %v713
    %931 = vmatpush1.bf16.msra.mxu0 %v712
    %932 = vmatprep.subr.bf16.mxu0 %v717
    %933 = vmatpush1.bf16.msra.mxu0 %v716
    %934 = vmatprep.subr.bf16.mxu0 %v721
    %935 = vmatpush1.bf16.msra.mxu0 %v720
    %936 = vmatprep.subr.bf16.mxu0 %v725
    %937 = vmatpush1.bf16.msra.mxu0 %v724
    %938 = vmatprep.subr.bf16.mxu0 %v729
    %939 = vmatpush1.bf16.msra.mxu0 %v728
    %940 = vmatprep.subr.bf16.mxu0 %v733
    %941 = vmatpush1.bf16.msra.mxu0 %v732
    %942 = vmatprep.subr.bf16.mxu0 %v737
    %943 = vmatpush1.bf16.msra.mxu0 %v736
    %944 = vmatprep.subr.bf16.mxu0 %v741
    %945 = vmatpush1.bf16.msra.mxu0 %v740
    %946 = vmatprep.subr.bf16.mxu0 0
    %947 = vmatpush1.bf16.msra.mxu0 0
    %948 = vmatprep.subr.bf16.mxu0 0
    %949 = vmatpush1.bf16.msra.mxu0 0
    %950 = vmatprep.subr.bf16.mxu0 0
    %951 = vmatpush1.bf16.msra.mxu0 0
    %952 = vmatprep.subr.bf16.mxu0 0
    %953 = vmatpush1.bf16.msra.mxu0 0
    %954 = vmatprep.subr.bf16.mxu0 0
    %955 = vmatpush1.bf16.msra.mxu0 0
    %956 = vmatprep.subr.bf16.mxu0 0
    %957 = vmatpush1.bf16.msra.mxu0 0
    %958 = vmatprep.subr.bf16.mxu0 0
    %959 = vmatpush1.bf16.msra.mxu0 0
    %960 = vmatprep.subr.bf16.mxu0 0
    %961 = vmatpush1.bf16.msra.mxu0 0
    %962 = vmatprep.mubr.bf16.mxu0 0
    %963 = vmatmul.mubr.bf16.gmra.mrb[0].mxu0 %v888
    %v964 = vpop.f32.mrb[0].mxu0
    %v965 = vadd.f32 0.0, %v964
    %v966 = vpop.f32.mrb[0].mxu0
    %v967 = vadd.f32 0.0, %v966
    %v968 = vpop.f32.mrb[0].mxu0
    %v969 = vpop.f32.mrb[0].mxu0
    %970 = vdwg.mxu0
    %v971 = vadd.f32 %v884, %v924
    %v972 = vadd.f32 %v885, %v926
    %v973 = vadd.f32 %v886, %v965
    %v974 = vadd.f32 %v887, %v967
    %v975 = vxor.u32 %v971, 2147483648
    %v976 = vmul.f32 %v975, 1.442695
    %v977 = vpow.pop %v976
    %v978 = vadd.f32 %v977, 1.0
    %v979 = vrcp.pop %v978
    %v980 = vmul.f32 1.0, %v979
    %v981 = vxor.u32 %v972, 2147483648
    %v982 = vmul.f32 %v981, 1.442695
    %v983 = vpow.pop %v982
    %v984 = vadd.f32 %v983, 1.0
    %v985 = vrcp.pop %v984
    %v986 = vmul.f32 1.0, %v985
    %v987 = vtanh.pop %v973
    %v988 = vxor.u32 %v974, 2147483648
    %v989 = vmul.f32 %v988, 1.442695
    %v990 = vpow.pop %v989
    %v991 = vadd.f32 %v990, 1.0
    %v992 = vrcp.pop %v991
    %v993 = vmul.f32 1.0, %v992
    %v994 = vmul.f32 %v986, %v881
    %v995 = vmul.f32 %v980, %v987
    %v996 = vadd.f32 %v994, %v995
    %v997 = vtanh.pop %v996
    %v998 = vmul.f32 %v993, %v997
    %v999 = vld [vmem:[#allocation2 + $0x40] sm:$0xff]
    %v1000 = vld [vmem:[#allocation2 + $0x48] sm:$0xff]
    %v1001 = vld [vmem:[#allocation2 + $0x50] sm:$0xff]
    %v1002 = vld [vmem:[#allocation2 + $0x58] sm:$0xff]
    %v1003 = vpack.c.bf16 %v998, %v998
    %1004 = vmatprep.subr.bf16.mxu0 %v711
    %1005 = vmatpush1.bf16.msra.mxu0 %v710
    %1006 = vmatprep.subr.bf16.mxu0 %v715
    %1007 = vmatpush1.bf16.msra.mxu0 %v714
    %1008 = vmatprep.subr.bf16.mxu0 %v719
    %1009 = vmatpush1.bf16.msra.mxu0 %v718
    %1010 = vmatprep.subr.bf16.mxu0 %v723
    %1011 = vmatpush1.bf16.msra.mxu0 %v722
    %1012 = vmatprep.subr.bf16.mxu0 %v727
    %1013 = vmatpush1.bf16.msra.mxu0 %v726
    %1014 = vmatprep.subr.bf16.mxu0 %v731
    %1015 = vmatpush1.bf16.msra.mxu0 %v730
    %1016 = vmatprep.subr.bf16.mxu0 %v735
    %1017 = vmatpush1.bf16.msra.mxu0 %v734
    %1018 = vmatprep.subr.bf16.mxu0 %v739
    %1019 = vmatpush1.bf16.msra.mxu0 %v738
    %1020 = vmatprep.subr.bf16.mxu0 0
    %1021 = vmatpush1.bf16.msra.mxu0 0
    %1022 = vmatprep.subr.bf16.mxu0 0
    %1023 = vmatpush1.bf16.msra.mxu0 0
    %1024 = vmatprep.subr.bf16.mxu0 0
    %1025 = vmatpush1.bf16.msra.mxu0 0
    %1026 = vmatprep.subr.bf16.mxu0 0
    %1027 = vmatpush1.bf16.msra.mxu0 0
    %1028 = vmatprep.subr.bf16.mxu0 0
    %1029 = vmatpush1.bf16.msra.mxu0 0
    %1030 = vmatprep.subr.bf16.mxu0 0
    %1031 = vmatpush1.bf16.msra.mxu0 0
    %1032 = vmatprep.subr.bf16.mxu0 0
    %1033 = vmatpush1.bf16.msra.mxu0 0
    %1034 = vmatprep.subr.bf16.mxu0 0
    %1035 = vmatpush1.bf16.msra.mxu0 0
    %1036 = vmatprep.mubr.bf16.mxu0 0
    %1037 = vmatmul.mubr.bf16.gmra.mrb[0].mxu0 %v1003
    %v1038 = vpop.f32.mrb[0].mxu0
    %v1039 = vadd.f32 0.0, %v1038
    %v1040 = vpop.f32.mrb[0].mxu0
    %v1041 = vadd.f32 0.0, %v1040
    %v1042 = vpop.f32.mrb[0].mxu0
    %v1043 = vpop.f32.mrb[0].mxu0
    %1044 = vdwg.mxu0
    %1045 = vmatprep.subr.bf16.mxu0 %v713
    %1046 = vmatpush1.bf16.msra.mxu0 %v712
    %1047 = vmatprep.subr.bf16.mxu0 %v717
    %1048 = vmatpush1.bf16.msra.mxu0 %v716
    %1049 = vmatprep.subr.bf16.mxu0 %v721
    %1050 = vmatpush1.bf16.msra.mxu0 %v720
    %1051 = vmatprep.subr.bf16.mxu0 %v725
    %1052 = vmatpush1.bf16.msra.mxu0 %v724
    %1053 = vmatprep.subr.bf16.mxu0 %v729
    %1054 = vmatpush1.bf16.msra.mxu0 %v728
    %1055 = vmatprep.subr.bf16.mxu0 %v733
    %1056 = vmatpush1.bf16.msra.mxu0 %v732
    %1057 = vmatprep.subr.bf16.mxu0 %v737
    %1058 = vmatpush1.bf16.msra.mxu0 %v736
    %1059 = vmatprep.subr.bf16.mxu0 %v741
    %1060 = vmatpush1.bf16.msra.mxu0 %v740
    %1061 = vmatprep.subr.bf16.mxu0 0
    %1062 = vmatpush1.bf16.msra.mxu0 0
    %1063 = vmatprep.subr.bf16.mxu0 0
    %1064 = vmatpush1.bf16.msra.mxu0 0
    %1065 = vmatprep.subr.bf16.mxu0 0
    %1066 = vmatpush1.bf16.msra.mxu0 0
    %1067 = vmatprep.subr.bf16.mxu0 0
    %1068 = vmatpush1.bf16.msra.mxu0 0
    %1069 = vmatprep.subr.bf16.mxu0 0
    %1070 = vmatpush1.bf16.msra.mxu0 0
    %1071 = vmatprep.subr.bf16.mxu0 0
    %1072 = vmatpush1.bf16.msra.mxu0 0
    %1073 = vmatprep.subr.bf16.mxu0 0
    %1074 = vmatpush1.bf16.msra.mxu0 0
    %1075 = vmatprep.subr.bf16.mxu0 0
    %1076 = vmatpush1.bf16.msra.mxu0 0
    %1077 = vmatprep.mubr.bf16.mxu0 0
    %1078 = vmatmul.mubr.bf16.gmra.mrb[0].mxu0 %v1003
    %v1079 = vpop.f32.mrb[0].mxu0
    %v1080 = vadd.f32 0.0, %v1079
    %v1081 = vpop.f32.mrb[0].mxu0
    %v1082 = vadd.f32 0.0, %v1081
    %v1083 = vpop.f32.mrb[0].mxu0
    %v1084 = vpop.f32.mrb[0].mxu0
    %1085 = vdwg.mxu0
    %v1086 = vadd.f32 %v999, %v1039
    %v1087 = vadd.f32 %v1000, %v1041
    %v1088 = vadd.f32 %v1001, %v1080
    %v1089 = vadd.f32 %v1002, %v1082
    %v1090 = vxor.u32 %v1086, 2147483648
    %v1091 = vmul.f32 %v1090, 1.442695
    %v1092 = vpow.pop %v1091
    %v1093 = vadd.f32 %v1092, 1.0
    %v1094 = vrcp.pop %v1093
    %v1095 = vmul.f32 1.0, %v1094
    %v1096 = vxor.u32 %v1087, 2147483648
    %v1097 = vmul.f32 %v1096, 1.442695
    %v1098 = vpow.pop %v1097
    %v1099 = vadd.f32 %v1098, 1.0
    %v1100 = vrcp.pop %v1099
    %v1101 = vmul.f32 1.0, %v1100
    %v1102 = vtanh.pop %v1088
    %v1103 = vxor.u32 %v1089, 2147483648
    %v1104 = vmul.f32 %v1103, 1.442695
    %v1105 = vpow.pop %v1104
    %v1106 = vadd.f32 %v1105, 1.0
    %v1107 = vrcp.pop %v1106
    %v1108 = vmul.f32 1.0, %v1107
    %v1109 = vmul.f32 %v1101, %v996
    %v1110 = vmul.f32 %v1095, %v1102
    %v1111 = vadd.f32 %v1109, %v1110
    %v1112 = vtanh.pop %v1111
    %v1113 = vmul.f32 %v1108, %v1112
    %v1114 = vld [vmem:[#allocation2 + $0x60] sm:$0xff]
    %v1115 = vld [vmem:[#allocation2 + $0x68] sm:$0xff]
    %v1116 = vld [vmem:[#allocation2 + $0x70] sm:$0xff]
    %v1117 = vld [vmem:[#allocation2 + $0x78] sm:$0xff]
    %v1118 = vpack.c.bf16 %v1113, %v1113
    %1119 = vmatprep.subr.bf16.mxu0 %v711
    %1120 = vmatpush1.bf16.msra.mxu0 %v710
    %1121 = vmatprep.subr.bf16.mxu0 %v715
    %1122 = vmatpush1.bf16.msra.mxu0 %v714
    %1123 = vmatprep.subr.bf16.mxu0 %v719
    %1124 = vmatpush1.bf16.msra.mxu0 %v718
    %1125 = vmatprep.subr.bf16.mxu0 %v723
    %1126 = vmatpush1.bf16.msra.mxu0 %v722
    %1127 = vmatprep.subr.bf16.mxu0 %v727
    %1128 = vmatpush1.bf16.msra.mxu0 %v726
    %1129 = vmatprep.subr.bf16.mxu0 %v731
    %1130 = vmatpush1.bf16.msra.mxu0 %v730
    %1131 = vmatprep.subr.bf16.mxu0 %v735
    %1132 = vmatpush1.bf16.msra.mxu0 %v734
    %1133 = vmatprep.subr.bf16.mxu0 %v739
    %1134 = vmatpush1.bf16.msra.mxu0 %v738
    %1135 = vmatprep.subr.bf16.mxu0 0
    %1136 = vmatpush1.bf16.msra.mxu0 0
    %1137 = vmatprep.subr.bf16.mxu0 0
    %1138 = vmatpush1.bf16.msra.mxu0 0
    %1139 = vmatprep.subr.bf16.mxu0 0
    %1140 = vmatpush1.bf16.msra.mxu0 0
    %1141 = vmatprep.subr.bf16.mxu0 0
    %1142 = vmatpush1.bf16.msra.mxu0 0
    %1143 = vmatprep.subr.bf16.mxu0 0
    %1144 = vmatpush1.bf16.msra.mxu0 0
    %1145 = vmatprep.subr.bf16.mxu0 0
    %1146 = vmatpush1.bf16.msra.mxu0 0
    %1147 = vmatprep.subr.bf16.mxu0 0
    %1148 = vmatpush1.bf16.msra.mxu0 0
    %1149 = vmatprep.subr.bf16.mxu0 0
    %1150 = vmatpush1.bf16.msra.mxu0 0
    %1151 = vmatprep.mubr.bf16.mxu0 0
    %1152 = vmatmul.mubr.bf16.gmra.mrb[0].mxu0 %v1118
    %v1153 = vpop.f32.mrb[0].mxu0
    %v1154 = vadd.f32 0.0, %v1153
    %v1155 = vpop.f32.mrb[0].mxu0
    %v1156 = vadd.f32 0.0, %v1155
    %v1157 = vpop.f32.mrb[0].mxu0
    %v1158 = vpop.f32.mrb[0].mxu0
    %1159 = vdwg.mxu0
    %1160 = vmatprep.subr.bf16.mxu0 %v713
    %1161 = vmatpush1.bf16.msra.mxu0 %v712
    %1162 = vmatprep.subr.bf16.mxu0 %v717
    %1163 = vmatpush1.bf16.msra.mxu0 %v716
    %1164 = vmatprep.subr.bf16.mxu0 %v721
    %1165 = vmatpush1.bf16.msra.mxu0 %v720
    %1166 = vmatprep.subr.bf16.mxu0 %v725
    %1167 = vmatpush1.bf16.msra.mxu0 %v724
    %1168 = vmatprep.subr.bf16.mxu0 %v729
    %1169 = vmatpush1.bf16.msra.mxu0 %v728
    %1170 = vmatprep.subr.bf16.mxu0 %v733
    %1171 = vmatpush1.bf16.msra.mxu0 %v732
    %1172 = vmatprep.subr.bf16.mxu0 %v737
    %1173 = vmatpush1.bf16.msra.mxu0 %v736
    %1174 = vmatprep.subr.bf16.mxu0 %v741
    %1175 = vmatpush1.bf16.msra.mxu0 %v740
    %1176 = vmatprep.subr.bf16.mxu0 0
    %1177 = vmatpush1.bf16.msra.mxu0 0
    %1178 = vmatprep.subr.bf16.mxu0 0
    %1179 = vmatpush1.bf16.msra.mxu0 0
    %1180 = vmatprep.subr.bf16.mxu0 0
    %1181 = vmatpush1.bf16.msra.mxu0 0
    %1182 = vmatprep.subr.bf16.mxu0 0
    %1183 = vmatpush1.bf16.msra.mxu0 0
    %1184 = vmatprep.subr.bf16.mxu0 0
    %1185 = vmatpush1.bf16.msra.mxu0 0
    %1186 = vmatprep.subr.bf16.mxu0 0
    %1187 = vmatpush1.bf16.msra.mxu0 0
    %1188 = vmatprep.subr.bf16.mxu0 0
    %1189 = vmatpush1.bf16.msra.mxu0 0
    %1190 = vmatprep.subr.bf16.mxu0 0
    %1191 = vmatpush1.bf16.msra.mxu0 0
    %1192 = vmatprep.mubr.bf16.mxu0 0
    %1193 = vmatmul.mubr.bf16.gmra.mrb[0].mxu0 %v1118
    %v1194 = vpop.f32.mrb[0].mxu0
    %v1195 = vadd.f32 0.0, %v1194
    %v1196 = vpop.f32.mrb[0].mxu0
    %v1197 = vadd.f32 0.0, %v1196
    %v1198 = vpop.f32.mrb[0].mxu0
    %v1199 = vpop.f32.mrb[0].mxu0
    %1200 = vdwg.mxu0
    %v1201 = vadd.f32 %v1114, %v1154
    %v1202 = vadd.f32 %v1115, %v1156
    %v1203 = vadd.f32 %v1116, %v1195
    %v1204 = vadd.f32 %v1117, %v1197
    %v1205 = vxor.u32 %v1201, 2147483648
    %v1206 = vmul.f32 %v1205, 1.442695
    %v1207 = vpow.pop %v1206
    %v1208 = vadd.f32 %v1207, 1.0
    %v1209 = vrcp.pop %v1208
    %v1210 = vmul.f32 1.0, %v1209
    %v1211 = vxor.u32 %v1202, 2147483648
    %v1212 = vmul.f32 %v1211, 1.442695
    %v1213 = vpow.pop %v1212
    %v1214 = vadd.f32 %v1213, 1.0
    %v1215 = vrcp.pop %v1214
    %v1216 = vmul.f32 1.0, %v1215
    %v1217 = vtanh.pop %v1203
    %v1218 = vxor.u32 %v1204, 2147483648
    %v1219 = vmul.f32 %v1218, 1.442695
    %v1220 = vpow.pop %v1219
    %v1221 = vadd.f32 %v1220, 1.0
    %v1222 = vrcp.pop %v1221
    %v1223 = vmul.f32 1.0, %v1222
    %v1224 = vmul.f32 %v1216, %v1111
    %v1225 = vmul.f32 %v1210, %v1217
    %v1226 = vadd.f32 %v1224, %v1225
    %v1227 = vtanh.pop %v1226
    %v1228 = vmul.f32 %v1223, %v1227
    %v1229 = vld [vmem:[#allocation2 + $0x80] sm:$0xff]
    %v1230 = vld [vmem:[#allocation2 + $0x88] sm:$0xff]
    %v1231 = vld [vmem:[#allocation2 + $0x90] sm:$0xff]
    %v1232 = vld [vmem:[#allocation2 + $0x98] sm:$0xff]
    %v1233 = vpack.c.bf16 %v1228, %v1228
    %1234 = vmatprep.subr.bf16.mxu0 %v711
    %1235 = vmatpush1.bf16.msra.mxu0 %v710
    %1236 = vmatprep.subr.bf16.mxu0 %v715
    %1237 = vmatpush1.bf16.msra.mxu0 %v714
    %1238 = vmatprep.subr.bf16.mxu0 %v719
    %1239 = vmatpush1.bf16.msra.mxu0 %v718
    %1240 = vmatprep.subr.bf16.mxu0 %v723
    %1241 = vmatpush1.bf16.msra.mxu0 %v722
    %1242 = vmatprep.subr.bf16.mxu0 %v727
    %1243 = vmatpush1.bf16.msra.mxu0 %v726
    %1244 = vmatprep.subr.bf16.mxu0 %v731
    %1245 = vmatpush1.bf16.msra.mxu0 %v730
    %1246 = vmatprep.subr.bf16.mxu0 %v735
    %1247 = vmatpush1.bf16.msra.mxu0 %v734
    %1248 = vmatprep.subr.bf16.mxu0 %v739
    %1249 = vmatpush1.bf16.msra.mxu0 %v738
    %1250 = vmatprep.subr.bf16.mxu0 0
    %1251 = vmatpush1.bf16.msra.mxu0 0
    %1252 = vmatprep.subr.bf16.mxu0 0
    %1253 = vmatpush1.bf16.msra.mxu0 0
    %1254 = vmatprep.subr.bf16.mxu0 0
    %1255 = vmatpush1.bf16.msra.mxu0 0
    %1256 = vmatprep.subr.bf16.mxu0 0
    %1257 = vmatpush1.bf16.msra.mxu0 0
    %1258 = vmatprep.subr.bf16.mxu0 0
    %1259 = vmatpush1.bf16.msra.mxu0 0
    %1260 = vmatprep.subr.bf16.mxu0 0
    %1261 = vmatpush1.bf16.msra.mxu0 0
    %1262 = vmatprep.subr.bf16.mxu0 0
    %1263 = vmatpush1.bf16.msra.mxu0 0
    %1264 = vmatprep.subr.bf16.mxu0 0
    %1265 = vmatpush1.bf16.msra.mxu0 0
    %1266 = vmatprep.mubr.bf16.mxu0 0
    %1267 = vmatmul.mubr.bf16.gmra.mrb[0].mxu0 %v1233
    %v1268 = vpop.f32.mrb[0].mxu0
    %v1269 = vadd.f32 0.0, %v1268
    %v1270 = vpop.f32.mrb[0].mxu0
    %v1271 = vadd.f32 0.0, %v1270
    %v1272 = vpop.f32.mrb[0].mxu0
    %v1273 = vpop.f32.mrb[0].mxu0
    %1274 = vdwg.mxu0
    %1275 = vmatprep.subr.bf16.mxu0 %v713
    %1276 = vmatpush1.bf16.msra.mxu0 %v712
    %1277 = vmatprep.subr.bf16.mxu0 %v717
    %1278 = vmatpush1.bf16.msra.mxu0 %v716
    %1279 = vmatprep.subr.bf16.mxu0 %v721
    %1280 = vmatpush1.bf16.msra.mxu0 %v720
    %1281 = vmatprep.subr.bf16.mxu0 %v725
    %1282 = vmatpush1.bf16.msra.mxu0 %v724
    %1283 = vmatprep.subr.bf16.mxu0 %v729
    %1284 = vmatpush1.bf16.msra.mxu0 %v728
    %1285 = vmatprep.subr.bf16.mxu0 %v733
    %1286 = vmatpush1.bf16.msra.mxu0 %v732
    %1287 = vmatprep.subr.bf16.mxu0 %v737
    %1288 = vmatpush1.bf16.msra.mxu0 %v736
    %1289 = vmatprep.subr.bf16.mxu0 %v741
    %1290 = vmatpush1.bf16.msra.mxu0 %v740
    %1291 = vmatprep.subr.bf16.mxu0 0
    %1292 = vmatpush1.bf16.msra.mxu0 0
    %1293 = vmatprep.subr.bf16.mxu0 0
    %1294 = vmatpush1.bf16.msra.mxu0 0
    %1295 = vmatprep.subr.bf16.mxu0 0
    %1296 = vmatpush1.bf16.msra.mxu0 0
    %1297 = vmatprep.subr.bf16.mxu0 0
    %1298 = vmatpush1.bf16.msra.mxu0 0
    %1299 = vmatprep.subr.bf16.mxu0 0
    %1300 = vmatpush1.bf16.msra.mxu0 0
    %1301 = vmatprep.subr.bf16.mxu0 0
    %1302 = vmatpush1.bf16.msra.mxu0 0
    %1303 = vmatprep.subr.bf16.mxu0 0
    %1304 = vmatpush1.bf16.msra.mxu0 0
    %1305 = vmatprep.subr.bf16.mxu0 0
    %1306 = vmatpush1.bf16.msra.mxu0 0
    %1307 = vmatprep.mubr.bf16.mxu0 0
    %1308 = vmatmul.mubr.bf16.gmra.mrb[0].mxu0 %v1233
    %v1309 = vpop.f32.mrb[0].mxu0
    %v1310 = vadd.f32 0.0, %v1309
    %v1311 = vpop.f32.mrb[0].mxu0
    %v1312 = vadd.f32 0.0, %v1311
    %v1313 = vpop.f32.mrb[0].mxu0
    %v1314 = vpop.f32.mrb[0].mxu0
    %1315 = vdwg.mxu0
    %v1316 = vadd.f32 %v1229, %v1269
    %v1317 = vadd.f32 %v1230, %v1271
    %v1318 = vadd.f32 %v1231, %v1310
    %v1319 = vadd.f32 %v1232, %v1312
    %v1320 = vxor.u32 %v1316, 2147483648
    %v1321 = vmul.f32 %v1320, 1.442695
    %v1322 = vpow.pop %v1321
    %v1323 = vadd.f32 %v1322, 1.0
    %v1324 = vrcp.pop %v1323
    %v1325 = vmul.f32 1.0, %v1324
    %v1326 = vxor.u32 %v1317, 2147483648
    %v1327 = vmul.f32 %v1326, 1.442695
    %v1328 = vpow.pop %v1327
    %v1329 = vadd.f32 %v1328, 1.0
    %v1330 = vrcp.pop %v1329
    %v1331 = vmul.f32 1.0, %v1330
    %v1332 = vtanh.pop %v1318
    %v1333 = vxor.u32 %v1319, 2147483648
    %v1334 = vmul.f32 %v1333, 1.442695
    %v1335 = vpow.pop %v1334
    %v1336 = vadd.f32 %v1335, 1.0
    %v1337 = vrcp.pop %v1336
    %v1338 = vmul.f32 1.0, %v1337
    %v1339 = vmul.f32 %v1331, %v1226
    %v1340 = vmul.f32 %v1325, %v1332
    %v1341 = vadd.f32 %v1339, %v1340
    %v1342 = vtanh.pop %v1341
    %v1343 = vmul.f32 %v1338, %v1342
    %v1344 = vld [vmem:[#allocation2 + $0xa0] sm:$0xff]
    %v1345 = vld [vmem:[#allocation2 + $0xa8] sm:$0xff]
    %v1346 = vld [vmem:[#allocation2 + $0xb0] sm:$0xff]
    %v1347 = vld [vmem:[#allocation2 + $0xb8] sm:$0xff]
    %v1348 = vpack.c.bf16 %v1343, %v1343
    %1349 = vmatprep.subr.bf16.mxu0 %v711
    %1350 = vmatpush1.bf16.msra.mxu0 %v710
    %1351 = vmatprep.subr.bf16.mxu0 %v715
    %1352 = vmatpush1.bf16.msra.mxu0 %v714
    %1353 = vmatprep.subr.bf16.mxu0 %v719
    %1354 = vmatpush1.bf16.msra.mxu0 %v718
    %1355 = vmatprep.subr.bf16.mxu0 %v723
    %1356 = vmatpush1.bf16.msra.mxu0 %v722
    %1357 = vmatprep.subr.bf16.mxu0 %v727
    %1358 = vmatpush1.bf16.msra.mxu0 %v726
    %1359 = vmatprep.subr.bf16.mxu0 %v731
    %1360 = vmatpush1.bf16.msra.mxu0 %v730
    %1361 = vmatprep.subr.bf16.mxu0 %v735
    %1362 = vmatpush1.bf16.msra.mxu0 %v734
    %1363 = vmatprep.subr.bf16.mxu0 %v739
    %1364 = vmatpush1.bf16.msra.mxu0 %v738
    %1365 = vmatprep.subr.bf16.mxu0 0
    %1366 = vmatpush1.bf16.msra.mxu0 0
    %1367 = vmatprep.subr.bf16.mxu0 0
    %1368 = vmatpush1.bf16.msra.mxu0 0
    %1369 = vmatprep.subr.bf16.mxu0 0
    %1370 = vmatpush1.bf16.msra.mxu0 0
    %1371 = vmatprep.subr.bf16.mxu0 0
    %1372 = vmatpush1.bf16.msra.mxu0 0
    %1373 = vmatprep.subr.bf16.mxu0 0
    %1374 = vmatpush1.bf16.msra.mxu0 0
    %1375 = vmatprep.subr.bf16.mxu0 0
    %1376 = vmatpush1.bf16.msra.mxu0 0
    %1377 = vmatprep.subr.bf16.mxu0 0
    %1378 = vmatpush1.bf16.msra.mxu0 0
    %1379 = vmatprep.subr.bf16.mxu0 0
    %1380 = vmatpush1.bf16.msra.mxu0 0
    %1381 = vmatprep.mubr.bf16.mxu0 0
    %1382 = vmatmul.mubr.bf16.gmra.mrb[0].mxu0 %v1348
    %v1383 = vpop.f32.mrb[0].mxu0
    %v1384 = vadd.f32 0.0, %v1383
    %v1385 = vpop.f32.mrb[0].mxu0
    %v1386 = vadd.f32 0.0, %v1385
    %v1387 = vpop.f32.mrb[0].mxu0
    %v1388 = vpop.f32.mrb[0].mxu0
    %1389 = vdwg.mxu0
    %1390 = vmatprep.subr.bf16.mxu0 %v713
    %1391 = vmatpush1.bf16.msra.mxu0 %v712
    %1392 = vmatprep.subr.bf16.mxu0 %v717
    %1393 = vmatpush1.bf16.msra.mxu0 %v716
    %1394 = vmatprep.subr.bf16.mxu0 %v721
    %1395 = vmatpush1.bf16.msra.mxu0 %v720
    %1396 = vmatprep.subr.bf16.mxu0 %v725
    %1397 = vmatpush1.bf16.msra.mxu0 %v724
    %1398 = vmatprep.subr.bf16.mxu0 %v729
    %1399 = vmatpush1.bf16.msra.mxu0 %v728
    %1400 = vmatprep.subr.bf16.mxu0 %v733
    %1401 = vmatpush1.bf16.msra.mxu0 %v732
    %1402 = vmatprep.subr.bf16.mxu0 %v737
    %1403 = vmatpush1.bf16.msra.mxu0 %v736
    %1404 = vmatprep.subr.bf16.mxu0 %v741
    %1405 = vmatpush1.bf16.msra.mxu0 %v740
    %1406 = vmatprep.subr.bf16.mxu0 0
    %1407 = vmatpush1.bf16.msra.mxu0 0
    %1408 = vmatprep.subr.bf16.mxu0 0
    %1409 = vmatpush1.bf16.msra.mxu0 0
    %1410 = vmatprep.subr.bf16.mxu0 0
    %1411 = vmatpush1.bf16.msra.mxu0 0
    %1412 = vmatprep.subr.bf16.mxu0 0
    %1413 = vmatpush1.bf16.msra.mxu0 0
    %1414 = vmatprep.subr.bf16.mxu0 0
    %1415 = vmatpush1.bf16.msra.mxu0 0
    %1416 = vmatprep.subr.bf16.mxu0 0
    %1417 = vmatpush1.bf16.msra.mxu0 0
    %1418 = vmatprep.subr.bf16.mxu0 0
    %1419 = vmatpush1.bf16.msra.mxu0 0
    %1420 = vmatprep.subr.bf16.mxu0 0
    %1421 = vmatpush1.bf16.msra.mxu0 0
    %1422 = vmatprep.mubr.bf16.mxu0 0
    %1423 = vmatmul.mubr.bf16.gmra.mrb[0].mxu0 %v1348
    %v1424 = vpop.f32.mrb[0].mxu0
    %v1425 = vadd.f32 0.0, %v1424
    %v1426 = vpop.f32.mrb[0].mxu0
    %v1427 = vadd.f32 0.0, %v1426
    %v1428 = vpop.f32.mrb[0].mxu0
    %v1429 = vpop.f32.mrb[0].mxu0
    %1430 = vdwg.mxu0
    %v1431 = vadd.f32 %v1344, %v1384
    %v1432 = vadd.f32 %v1345, %v1386
    %v1433 = vadd.f32 %v1346, %v1425
    %v1434 = vadd.f32 %v1347, %v1427
    %v1435 = vxor.u32 %v1431, 2147483648
    %v1436 = vmul.f32 %v1435, 1.442695
    %v1437 = vpow.pop %v1436
    %v1438 = vadd.f32 %v1437, 1.0
    %v1439 = vrcp.pop %v1438
    %v1440 = vmul.f32 1.0, %v1439
    %v1441 = vxor.u32 %v1432, 2147483648
    %v1442 = vmul.f32 %v1441, 1.442695
    %v1443 = vpow.pop %v1442
    %v1444 = vadd.f32 %v1443, 1.0
    %v1445 = vrcp.pop %v1444
    %v1446 = vmul.f32 1.0, %v1445
    %v1447 = vtanh.pop %v1433
    %v1448 = vxor.u32 %v1434, 2147483648
    %v1449 = vmul.f32 %v1448, 1.442695
    %v1450 = vpow.pop %v1449
    %v1451 = vadd.f32 %v1450, 1.0
    %v1452 = vrcp.pop %v1451
    %v1453 = vmul.f32 1.0, %v1452
    %v1454 = vmul.f32 %v1446, %v1341
    %v1455 = vmul.f32 %v1440, %v1447
    %v1456 = vadd.f32 %v1454, %v1455
    %v1457 = vtanh.pop %v1456
    %v1458 = vmul.f32 %v1453, %v1457
    %v1459 = vld [vmem:[#allocation2 + $0xc0] sm:$0xff]
    %v1460 = vld [vmem:[#allocation2 + $0xc8] sm:$0xff]
    %v1461 = vld [vmem:[#allocation2 + $0xd0] sm:$0xff]
    %v1462 = vld [vmem:[#allocation2 + $0xd8] sm:$0xff]
    %v1463 = vpack.c.bf16 %v1458, %v1458
    %1464 = vmatprep.subr.bf16.mxu0 %v711
    %1465 = vmatpush1.bf16.msra.mxu0 %v710
    %1466 = vmatprep.subr.bf16.mxu0 %v715
    %1467 = vmatpush1.bf16.msra.mxu0 %v714
    %1468 = vmatprep.subr.bf16.mxu0 %v719
    %1469 = vmatpush1.bf16.msra.mxu0 %v718
    %1470 = vmatprep.subr.bf16.mxu0 %v723
    %1471 = vmatpush1.bf16.msra.mxu0 %v722
    %1472 = vmatprep.subr.bf16.mxu0 %v727
    %1473 = vmatpush1.bf16.msra.mxu0 %v726
    %1474 = vmatprep.subr.bf16.mxu0 %v731
    %1475 = vmatpush1.bf16.msra.mxu0 %v730
    %1476 = vmatprep.subr.bf16.mxu0 %v735
    %1477 = vmatpush1.bf16.msra.mxu0 %v734
    %1478 = vmatprep.subr.bf16.mxu0 %v739
    %1479 = vmatpush1.bf16.msra.mxu0 %v738
    %1480 = vmatprep.subr.bf16.mxu0 0
    %1481 = vmatpush1.bf16.msra.mxu0 0
    %1482 = vmatprep.subr.bf16.mxu0 0
    %1483 = vmatpush1.bf16.msra.mxu0 0
    %1484 = vmatprep.subr.bf16.mxu0 0
    %1485 = vmatpush1.bf16.msra.mxu0 0
    %1486 = vmatprep.subr.bf16.mxu0 0
    %1487 = vmatpush1.bf16.msra.mxu0 0
    %1488 = vmatprep.subr.bf16.mxu0 0
    %1489 = vmatpush1.bf16.msra.mxu0 0
    %1490 = vmatprep.subr.bf16.mxu0 0
    %1491 = vmatpush1.bf16.msra.mxu0 0
    %1492 = vmatprep.subr.bf16.mxu0 0
    %1493 = vmatpush1.bf16.msra.mxu0 0
    %1494 = vmatprep.subr.bf16.mxu0 0
    %1495 = vmatpush1.bf16.msra.mxu0 0
    %1496 = vmatprep.mubr.bf16.mxu0 0
    %1497 = vmatmul.mubr.bf16.gmra.mrb[0].mxu0 %v1463
    %v1498 = vpop.f32.mrb[0].mxu0
    %v1499 = vadd.f32 0.0, %v1498
    %v1500 = vpop.f32.mrb[0].mxu0
    %v1501 = vadd.f32 0.0, %v1500
    %v1502 = vpop.f32.mrb[0].mxu0
    %v1503 = vpop.f32.mrb[0].mxu0
    %1504 = vdwg.mxu0
    %1505 = vmatprep.subr.bf16.mxu0 %v713
    %1506 = vmatpush1.bf16.msra.mxu0 %v712
    %1507 = vmatprep.subr.bf16.mxu0 %v717
    %1508 = vmatpush1.bf16.msra.mxu0 %v716
    %1509 = vmatprep.subr.bf16.mxu0 %v721
    %1510 = vmatpush1.bf16.msra.mxu0 %v720
    %1511 = vmatprep.subr.bf16.mxu0 %v725
    %1512 = vmatpush1.bf16.msra.mxu0 %v724
    %1513 = vmatprep.subr.bf16.mxu0 %v729
    %1514 = vmatpush1.bf16.msra.mxu0 %v728
    %1515 = vmatprep.subr.bf16.mxu0 %v733
    %1516 = vmatpush1.bf16.msra.mxu0 %v732
    %1517 = vmatprep.subr.bf16.mxu0 %v737
    %1518 = vmatpush1.bf16.msra.mxu0 %v736
    %1519 = vmatprep.subr.bf16.mxu0 %v741
    %1520 = vmatpush1.bf16.msra.mxu0 %v740
    %1521 = vmatprep.subr.bf16.mxu0 0
    %1522 = vmatpush1.bf16.msra.mxu0 0
    %1523 = vmatprep.subr.bf16.mxu0 0
    %1524 = vmatpush1.bf16.msra.mxu0 0
    %1525 = vmatprep.subr.bf16.mxu0 0
    %1526 = vmatpush1.bf16.msra.mxu0 0
    %1527 = vmatprep.subr.bf16.mxu0 0
    %1528 = vmatpush1.bf16.msra.mxu0 0
    %1529 = vmatprep.subr.bf16.mxu0 0
    %1530 = vmatpush1.bf16.msra.mxu0 0
    %1531 = vmatprep.subr.bf16.mxu0 0
    %1532 = vmatpush1.bf16.msra.mxu0 0
    %1533 = vmatprep.subr.bf16.mxu0 0
    %1534 = vmatpush1.bf16.msra.mxu0 0
    %1535 = vmatprep.subr.bf16.mxu0 0
    %1536 = vmatpush1.bf16.msra.mxu0 0
    %1537 = vmatprep.mubr.bf16.mxu0 0
    %1538 = vmatmul.mubr.bf16.gmra.mrb[0].mxu0 %v1463
    %v1539 = vpop.f32.mrb[0].mxu0
    %v1540 = vadd.f32 0.0, %v1539
    %v1541 = vpop.f32.mrb[0].mxu0
    %v1542 = vadd.f32 0.0, %v1541
    %v1543 = vpop.f32.mrb[0].mxu0
    %v1544 = vpop.f32.mrb[0].mxu0
    %1545 = vdwg.mxu0
    %v1546 = vadd.f32 %v1459, %v1499
    %v1547 = vadd.f32 %v1460, %v1501
    %v1548 = vadd.f32 %v1461, %v1540
    %v1549 = vadd.f32 %v1462, %v1542
    %v1550 = vxor.u32 %v1546, 2147483648
    %v1551 = vmul.f32 %v1550, 1.442695
    %v1552 = vpow.pop %v1551
    %v1553 = vadd.f32 %v1552, 1.0
    %v1554 = vrcp.pop %v1553
    %v1555 = vmul.f32 1.0, %v1554
    %v1556 = vxor.u32 %v1547, 2147483648
    %v1557 = vmul.f32 %v1556, 1.442695
    %v1558 = vpow.pop %v1557
    %v1559 = vadd.f32 %v1558, 1.0
    %v1560 = vrcp.pop %v1559
    %v1561 = vmul.f32 1.0, %v1560
    %v1562 = vtanh.pop %v1548
    %v1563 = vxor.u32 %v1549, 2147483648
    %v1564 = vmul.f32 %v1563, 1.442695
    %v1565 = vpow.pop %v1564
    %v1566 = vadd.f32 %v1565, 1.0
    %v1567 = vrcp.pop %v1566
    %v1568 = vmul.f32 1.0, %v1567
    %v1569 = vmul.f32 %v1561, %v1456
    %v1570 = vmul.f32 %v1555, %v1562
    %v1571 = vadd.f32 %v1569, %v1570
    %v1572 = vtanh.pop %v1571
    %v1573 = vmul.f32 %v1568, %v1572
    %v1574 = vld [vmem:[#allocation2 + $0xe0] sm:$0xff]
    %v1575 = vld [vmem:[#allocation2 + $0xe8] sm:$0xff]
    %v1576 = vld [vmem:[#allocation2 + $0xf0] sm:$0xff]
    %v1577 = vld [vmem:[#allocation2 + $0xf8] sm:$0xff]
    %v1578 = vpack.c.bf16 %v1573, %v1573
    %1579 = vmatprep.subr.bf16.mxu0 %v711
    %1580 = vmatpush1.bf16.msra.mxu0 %v710
    %1581 = vmatprep.subr.bf16.mxu0 %v715
    %1582 = vmatpush1.bf16.msra.mxu0 %v714
    %1583 = vmatprep.subr.bf16.mxu0 %v719
    %1584 = vmatpush1.bf16.msra.mxu0 %v718
    %1585 = vmatprep.subr.bf16.mxu0 %v723
    %1586 = vmatpush1.bf16.msra.mxu0 %v722
    %1587 = vmatprep.subr.bf16.mxu0 %v727
    %1588 = vmatpush1.bf16.msra.mxu0 %v726
    %1589 = vmatprep.subr.bf16.mxu0 %v731
    %1590 = vmatpush1.bf16.msra.mxu0 %v730
    %1591 = vmatprep.subr.bf16.mxu0 %v735
    %1592 = vmatpush1.bf16.msra.mxu0 %v734
    %1593 = vmatprep.subr.bf16.mxu0 %v739
    %1594 = vmatpush1.bf16.msra.mxu0 %v738
    %1595 = vmatprep.subr.bf16.mxu0 0
    %1596 = vmatpush1.bf16.msra.mxu0 0
    %1597 = vmatprep.subr.bf16.mxu0 0
    %1598 = vmatpush1.bf16.msra.mxu0 0
    %1599 = vmatprep.subr.bf16.mxu0 0
    %1600 = vmatpush1.bf16.msra.mxu0 0
    %1601 = vmatprep.subr.bf16.mxu0 0
    %1602 = vmatpush1.bf16.msra.mxu0 0
    %1603 = vmatprep.subr.bf16.mxu0 0
    %1604 = vmatpush1.bf16.msra.mxu0 0
    %1605 = vmatprep.subr.bf16.mxu0 0
    %1606 = vmatpush1.bf16.msra.mxu0 0
    %1607 = vmatprep.subr.bf16.mxu0 0
    %1608 = vmatpush1.bf16.msra.mxu0 0
    %1609 = vmatprep.subr.bf16.mxu0 0
    %1610 = vmatpush1.bf16.msra.mxu0 0
    %1611 = vmatprep.mubr.bf16.mxu0 0
    %1612 = vmatmul.mubr.bf16.gmra.mrb[0].mxu0 %v1578
    %v1613 = vpop.f32.mrb[0].mxu0
    %v1614 = vadd.f32 0.0, %v1613
    %v1615 = vpop.f32.mrb[0].mxu0
    %v1616 = vadd.f32 0.0, %v1615
    %v1617 = vpop.f32.mrb[0].mxu0
    %v1618 = vpop.f32.mrb[0].mxu0
    %1619 = vdwg.mxu0
    %1620 = vmatprep.subr.bf16.mxu0 %v713
    %1621 = vmatpush1.bf16.msra.mxu0 %v712
    %1622 = vmatprep.subr.bf16.mxu0 %v717
    %1623 = vmatpush1.bf16.msra.mxu0 %v716
    %1624 = vmatprep.subr.bf16.mxu0 %v721
    %1625 = vmatpush1.bf16.msra.mxu0 %v720
    %1626 = vmatprep.subr.bf16.mxu0 %v725
    %1627 = vmatpush1.bf16.msra.mxu0 %v724
    %1628 = vmatprep.subr.bf16.mxu0 %v729
    %1629 = vmatpush1.bf16.msra.mxu0 %v728
    %1630 = vmatprep.subr.bf16.mxu0 %v733
    %1631 = vmatpush1.bf16.msra.mxu0 %v732
    %1632 = vmatprep.subr.bf16.mxu0 %v737
    %1633 = vmatpush1.bf16.msra.mxu0 %v736
    %1634 = vmatprep.subr.bf16.mxu0 %v741
    %1635 = vmatpush1.bf16.msra.mxu0 %v740
    %1636 = vmatprep.subr.bf16.mxu0 0
    %1637 = vmatpush1.bf16.msra.mxu0 0
    %1638 = vmatprep.subr.bf16.mxu0 0
    %1639 = vmatpush1.bf16.msra.mxu0 0
    %1640 = vmatprep.subr.bf16.mxu0 0
    %1641 = vmatpush1.bf16.msra.mxu0 0
    %1642 = vmatprep.subr.bf16.mxu0 0
    %1643 = vmatpush1.bf16.msra.mxu0 0
    %1644 = vmatprep.subr.bf16.mxu0 0
    %1645 = vmatpush1.bf16.msra.mxu0 0
    %1646 = vmatprep.subr.bf16.mxu0 0
    %1647 = vmatpush1.bf16.msra.mxu0 0
    %1648 = vmatprep.subr.bf16.mxu0 0
    %1649 = vmatpush1.bf16.msra.mxu0 0
    %1650 = vmatprep.subr.bf16.mxu0 0
    %1651 = vmatpush1.bf16.msra.mxu0 0
    %1652 = vmatprep.mubr.bf16.mxu0 0
    %1653 = vmatmul.mubr.bf16.gmra.mrb[0].mxu0 %v1578
    %v1654 = vpop.f32.mrb[0].mxu0
    %v1655 = vadd.f32 0.0, %v1654
    %v1656 = vpop.f32.mrb[0].mxu0
    %v1657 = vadd.f32 0.0, %v1656
    %v1658 = vpop.f32.mrb[0].mxu0
    %v1659 = vpop.f32.mrb[0].mxu0
    %1660 = vdwg.mxu0
    %v1661 = vadd.f32 %v1574, %v1614
    %v1662 = vadd.f32 %v1575, %v1616
    %v1663 = vadd.f32 %v1576, %v1655
    %v1664 = vadd.f32 %v1577, %v1657
    %v1665 = vxor.u32 %v1661, 2147483648
    %v1666 = vmul.f32 %v1665, 1.442695
    %v1667 = vpow.pop %v1666
    %v1668 = vadd.f32 %v1667, 1.0
    %v1669 = vrcp.pop %v1668
    %v1670 = vmul.f32 1.0, %v1669
    %v1671 = vxor.u32 %v1662, 2147483648
    %v1672 = vmul.f32 %v1671, 1.442695
    %v1673 = vpow.pop %v1672
    %v1674 = vadd.f32 %v1673, 1.0
    %v1675 = vrcp.pop %v1674
    %v1676 = vmul.f32 1.0, %v1675
    %v1677 = vtanh.pop %v1663
    %v1678 = vxor.u32 %v1664, 2147483648
    %v1679 = vmul.f32 %v1678, 1.442695
    %v1680 = vpow.pop %v1679
    %v1681 = vadd.f32 %v1680, 1.0
    %v1682 = vrcp.pop %v1681
    %v1683 = vmul.f32 1.0, %v1682
    %v1684 = vmul.f32 %v1676, %v1571
    %v1685 = vmul.f32 %v1670, %v1677
    %v1686 = vadd.f32 %v1684, %v1685
    %v1687 = vtanh.pop %v1686
    %v1688 = vmul.f32 %v1683, %v1687
    %1689 = vst [vmem:[%s5] sm:$0xff] %v1688
    // Predicated region
    $region26: #{_headline_forward.1} parent=1 // pred_check
      _
    $region27: #{_headline_forward.1} parent=1 // pred_check_branch
      %1691 = sbr.rel (0) target = $region29
    $region28: #{_headline_forward.1} parent=1 // pred_region
      _
    $region29: #{_headline_forward.1} parent=1 // pred_fallthru
      _
    // Predicated region
    $region30: #{_headline_forward.1} parent=1 // pred_check
      _
    $region31: #{_headline_forward.1} parent=1 // pred_check_branch
      %1693 = sbr.rel (0) target = $region33
    $region32: #{_headline_forward.1} parent=1 // pred_region
      _
    $region33: #{_headline_forward.1} parent=1 // pred_fallthru
      _
    %1694 = vsyncpa [#allocation4], 1

</llo_original>
